<compile_context>
chip_gen: v5e
topology: v5e:2x2
jax: 0.10.0
libtpu: 0.0.40
codegen_flags: <defaults>
</compile_context>

<pallas_src>
import jax
import jax.numpy as jnp
import numpy as np
from jax import lax
from jax.experimental import pallas as pl
from jax.experimental.pallas import tpu as pltpu

LN_EPS = 1e-12


def _bert_embeddings_kernel(ids_ref, tts_ref,              # scalar prefetch (SMEM): (B, S) int32 each
                            word_hbm, tt_hbm,              # HBM refs: (V, H) float32 each
                            pos_ref, gamma_ref, beta_ref,  # VMEM tiles: (T, H), (1, H), (1, H)
                            out_ref,                       # VMEM out tile: (T, H)
                            wbuf, tbuf, sems):             # scratch: (T,H), (T,H), DMA sems (2,T)
    b = pl.program_id(0)
    st = pl.program_id(1)
    T = out_ref.shape[0]
    base = st * T

    # Issue all 2*T row-gather DMAs up front; all stay in flight (one sem per row).
    def _start(i, carry):
        wid = ids_ref[b, base + i]
        tid = tts_ref[b, base + i]
        pltpu.make_async_copy(word_hbm.at[pl.ds(wid, 1)],
                              wbuf.at[pl.ds(i, 1)], sems.at[0, i]).start()
        pltpu.make_async_copy(tt_hbm.at[pl.ds(tid, 1)],
                              tbuf.at[pl.ds(i, 1)], sems.at[1, i]).start()
        return carry

    lax.fori_loop(0, T, _start, 0, unroll=True)

    # Wait for all gathered rows.
    def _wait(i, carry):
        pltpu.make_async_copy(word_hbm.at[pl.ds(0, 1)],
                              wbuf.at[pl.ds(i, 1)], sems.at[0, i]).wait()
        pltpu.make_async_copy(tt_hbm.at[pl.ds(0, 1)],
                              tbuf.at[pl.ds(i, 1)], sems.at[1, i]).wait()
        return carry

    lax.fori_loop(0, T, _wait, 0, unroll=True)

    # Fused three-way add + LayerNorm over the hidden dim (eps = 1e-12, affine).
    emb = wbuf[...] + tbuf[...] + pos_ref[...]
    mean = jnp.mean(emb, axis=-1, keepdims=True)
    centered = emb - mean
    var = jnp.mean(jnp.square(centered), axis=-1, keepdims=True)
    norm = centered * lax.rsqrt(var + LN_EPS)
    out_ref[...] = (norm * gamma_ref[...] + beta_ref[...]).astype(out_ref.dtype)


def _pick_token_tile(S):
    # Largest sublane-aligned tile that evenly divides S (caps per-step VMEM / DMA count).
    for t in (512, 256, 128, 64, 32, 16, 8):
        if S % t == 0:
            return t
    return S  # fall back to the full (untiled) sequence


def bert_embeddings(input_ids, token_type_ids, attention_mask,
                    word_table, pos_table, tt_table, gamma, beta):
    """input_ids / token_type_ids: (B, S) int. Returns (embeddings (B, S, H), attention_mask)."""
    B, S = input_ids.shape
    V, H = word_table.shape
    T = _pick_token_tile(S)
    n_s = S // T

    ids = input_ids.astype(jnp.int32)
    tts = token_type_ids.astype(jnp.int32)

    # Advisory hint: this kernel is a memory-bound gather + LayerNorm.
    cost = pl.CostEstimate(
        flops=10 * B * S * H,                       # adds + LayerNorm arithmetic
        transcendentals=B * S,                      # one rsqrt per token
        bytes_accessed=4 * (3 * B * S * H + S * H), # gathered word/tt rows + output + positions
    )

    grid_spec = pltpu.PrefetchScalarGridSpec(
        num_scalar_prefetch=2,                      # ids, token_type_ids -> SMEM
        grid=(B, n_s),
        in_specs=[
            pl.BlockSpec(memory_space=pl.ANY),                       # word table, stays in HBM
            pl.BlockSpec(memory_space=pl.ANY),                       # token-type table, stays in HBM
            pl.BlockSpec((T, H), lambda b, s, ids, tts: (s, 0)),     # position rows for this tile
            pl.BlockSpec((1, H), lambda b, s, ids, tts: (0, 0)),     # LN gamma
            pl.BlockSpec((1, H), lambda b, s, ids, tts: (0, 0)),     # LN beta
        ],
        out_specs=pl.BlockSpec((None, T, H), lambda b, s, ids, tts: (b, s, 0)),
        scratch_shapes=[
            pltpu.VMEM((T, H), jnp.float32),        # gathered word rows
            pltpu.VMEM((T, H), jnp.float32),        # gathered token-type rows
            pltpu.SemaphoreType.DMA((2, T)),        # one DMA sem per in-flight row copy
        ],
    )

    out = pl.pallas_call(
        _bert_embeddings_kernel,
        out_shape=jax.ShapeDtypeStruct((B, S, H), jnp.float32),
        grid_spec=grid_spec,
        compiler_params=pltpu.CompilerParams(
            dimension_semantics=("parallel", "parallel")),
        cost_estimate=cost,
    )(ids, tts, word_table, tt_table, pos_table, gamma, beta)

    return out, attention_mask


def _reference(input_ids, token_type_ids, word_table, pos_table, tt_table, gamma, beta):
    w = word_table[input_ids]                              # (B, S, H)
    p = pos_table[jnp.arange(input_ids.shape[1])][None]    # (1, S, H)
    t = tt_table[token_type_ids]
    emb = w + p + t
    mean = emb.mean(-1, keepdims=True)
    var = ((emb - mean) ** 2).mean(-1, keepdims=True)
    norm = (emb - mean) / jnp.sqrt(var + LN_EPS)
    return norm * gamma[None] + beta[None]


if __name__ == "__main__":
    B, S, H = 2, 8, 32
    V = 512          # synthetic (small) vocab in place of len(BertTokenizer)
    P = 64           # synthetic max_position_embeddings

    key = jax.random.PRNGKey(0)
    k_w, k_p, k_t, k_ids = jax.random.split(key, 4)

    word_table = 0.02 * jax.random.normal(k_w, (V, H), jnp.float32)
    word_table = word_table.at[0].set(0.0)        # padding_idx=0
    pos_table = 0.02 * jax.random.normal(k_p, (P, H), jnp.float32)
    tt_table = 0.02 * jax.random.normal(k_t, (V, H), jnp.float32)
    gamma = jnp.ones((1, H), jnp.float32)
    beta = jnp.zeros((1, H), jnp.float32)

    # Synthetic "tokenizer outputs": padded ids, token_type_ids=0, mask from lengths.
    input_ids = jax.random.randint(k_ids, (B, S), 1, V, dtype=jnp.int32)
    lengths = jnp.array([S, S - 2], jnp.int32)
    attention_mask = (jnp.arange(S)[None, :] < lengths[:, None]).astype(jnp.int32)
    input_ids = input_ids * attention_mask        # pad token = 0
    token_type_ids = jnp.zeros((B, S), jnp.int32)

    emb, mask = bert_embeddings(input_ids, token_type_ids, attention_mask,
                                word_table, pos_table, tt_table, gamma, beta)
    emb = jax.block_until_ready(emb)

    ref = _reference(input_ids, token_type_ids, word_table, pos_table, tt_table, gamma, beta)
    assert emb.shape == (B, S, H)
    assert np.allclose(np.asarray(emb), np.asarray(ref), atol=1e-4, rtol=1e-4)
    print("KERNEL_OK")
</pallas_src>

<mosaic_0001>
module attributes {stable_mosaic.version = 11 : i64} {
  func.func @_bert_embeddings_kernel(%arg0: i32, %arg1: i32, %arg2: memref<2x8xi32, #tpu.memory_space<smem>>, %arg3: memref<2x8xi32, #tpu.memory_space<smem>>, %arg4: memref<512x32xf32, #tpu.memory_space<any>>, %arg5: memref<512x32xf32, #tpu.memory_space<any>>, %arg6: memref<8x32xf32, #tpu.memory_space<vmem>>, %arg7: memref<1x32xf32, #tpu.memory_space<vmem>>, %arg8: memref<1x32xf32, #tpu.memory_space<vmem>>, %arg9: memref<1x8x32xf32, #tpu.memory_space<vmem>>, %arg10: memref<8x32xf32, #tpu.memory_space<vmem>>, %arg11: memref<8x32xf32, #tpu.memory_space<vmem>>, %arg12: memref<2x8x!tpu.dma_semaphore, #tpu.memory_space<semaphore_mem>>) attributes {dimension_semantics = [#tpu.dimension_semantics<parallel>, #tpu.dimension_semantics<parallel>], iteration_bounds = array<i64: 2, 1>, scalar_prefetch = 2 : i64, scratch_operands = 3 : i64, tpu.core_type = #tpu.core_type<tc>, window_params = [{}, {}, {transform_indices = @transform_2, window_bounds = array<i64: 8, 32>}, {pipeline_mode = #tpu.pipeline_mode<synchronous>, transform_indices = @transform_3, window_bounds = array<i64: 1, 32>}, {pipeline_mode = #tpu.pipeline_mode<synchronous>, transform_indices = @transform_4, window_bounds = array<i64: 1, 32>}, {transform_indices = @transform_5, window_bounds = array<i64: 1, 8, 32>}]} {
    %c8_i32 = arith.constant 8 : i32
    %0 = arith.muli %arg1, %c8_i32 : i32
    %c0_i32 = arith.constant 0 : i32
    %1 = arith.addi %0, %c0_i32 : i32
    %2 = arith.index_cast %arg0 : i32 to index
    %3 = arith.index_cast %1 : i32 to index
    %4 = memref.load %arg2[%2, %3] : memref<2x8xi32, #tpu.memory_space<smem>>
    %5 = arith.addi %0, %c0_i32 : i32
    %6 = arith.index_cast %arg0 : i32 to index
    %7 = arith.index_cast %5 : i32 to index
    %8 = memref.load %arg3[%6, %7] : memref<2x8xi32, #tpu.memory_space<smem>>
    %c0_i32_0 = arith.constant 0 : i32
    %c0_i32_1 = arith.constant 0 : i32
    %9 = tpu.memref_slice %arg4[%4, %c0_i32_1] : memref<512x32xf32, #tpu.memory_space<any>> -> memref<1x32xf32, #tpu.memory_space<any>>
    %c0_i32_2 = arith.constant 0 : i32
    %10 = tpu.memref_slice %arg10[%c0_i32, %c0_i32_2] : memref<8x32xf32, #tpu.memory_space<vmem>> -> memref<1x32xf32, #tpu.memory_space<vmem>>
    %11 = tpu.memref_slice %arg12[%c0_i32_0, %c0_i32] : memref<2x8x!tpu.dma_semaphore, #tpu.memory_space<semaphore_mem>> -> memref<1x1x!tpu.dma_semaphore, #tpu.memory_space<semaphore_mem>>
    %12 = tpu.memref_squeeze %11 : memref<1x1x!tpu.dma_semaphore, #tpu.memory_space<semaphore_mem>> -> memref<!tpu.dma_semaphore, #tpu.memory_space<semaphore_mem>>
    tpu.enqueue_dma source(%9 : memref<1x32xf32, #tpu.memory_space<any>>) target(%10 : memref<1x32xf32, #tpu.memory_space<vmem>>) target_semaphore(%12 : memref<!tpu.dma_semaphore, #tpu.memory_space<semaphore_mem>>)
    %c1_i32 = arith.constant 1 : i32
    %c0_i32_3 = arith.constant 0 : i32
    %13 = tpu.memref_slice %arg5[%8, %c0_i32_3] : memref<512x32xf32, #tpu.memory_space<any>> -> memref<1x32xf32, #tpu.memory_space<any>>
    %c0_i32_4 = arith.constant 0 : i32
    %14 = tpu.memref_slice %arg11[%c0_i32, %c0_i32_4] : memref<8x32xf32, #tpu.memory_space<vmem>> -> memref<1x32xf32, #tpu.memory_space<vmem>>
    %15 = tpu.memref_slice %arg12[%c1_i32, %c0_i32] : memref<2x8x!tpu.dma_semaphore, #tpu.memory_space<semaphore_mem>> -> memref<1x1x!tpu.dma_semaphore, #tpu.memory_space<semaphore_mem>>
    %16 = tpu.memref_squeeze %15 : memref<1x1x!tpu.dma_semaphore, #tpu.memory_space<semaphore_mem>> -> memref<!tpu.dma_semaphore, #tpu.memory_space<semaphore_mem>>
    tpu.enqueue_dma source(%13 : memref<1x32xf32, #tpu.memory_space<any>>) target(%14 : memref<1x32xf32, #tpu.memory_space<vmem>>) target_semaphore(%16 : memref<!tpu.dma_semaphore, #tpu.memory_space<semaphore_mem>>)
    %c1_i32_5 = arith.constant 1 : i32
    %17 = arith.addi %0, %c1_i32_5 : i32
    %18 = arith.index_cast %arg0 : i32 to index
    %19 = arith.index_cast %17 : i32 to index
    %20 = memref.load %arg2[%18, %19] : memref<2x8xi32, #tpu.memory_space<smem>>
    %21 = arith.addi %0, %c1_i32_5 : i32
    %22 = arith.index_cast %arg0 : i32 to index
    %23 = arith.index_cast %21 : i32 to index
    %24 = memref.load %arg3[%22, %23] : memref<2x8xi32, #tpu.memory_space<smem>>
    %c0_i32_6 = arith.constant 0 : i32
    %c0_i32_7 = arith.constant 0 : i32
    %25 = tpu.memref_slice %arg4[%20, %c0_i32_7] : memref<512x32xf32, #tpu.memory_space<any>> -> memref<1x32xf32, #tpu.memory_space<any>>
    %c0_i32_8 = arith.constant 0 : i32
    %26 = tpu.memref_slice %arg10[%c1_i32_5, %c0_i32_8] : memref<8x32xf32, #tpu.memory_space<vmem>> -> memref<1x32xf32, #tpu.memory_space<vmem>>
    %27 = tpu.memref_slice %arg12[%c0_i32_6, %c1_i32_5] : memref<2x8x!tpu.dma_semaphore, #tpu.memory_space<semaphore_mem>> -> memref<1x1x!tpu.dma_semaphore, #tpu.memory_space<semaphore_mem>>
    %28 = tpu.memref_squeeze %27 : memref<1x1x!tpu.dma_semaphore, #tpu.memory_space<semaphore_mem>> -> memref<!tpu.dma_semaphore, #tpu.memory_space<semaphore_mem>>
    tpu.enqueue_dma source(%25 : memref<1x32xf32, #tpu.memory_space<any>>) target(%26 : memref<1x32xf32, #tpu.memory_space<vmem>>) target_semaphore(%28 : memref<!tpu.dma_semaphore, #tpu.memory_space<semaphore_mem>>)
    %c1_i32_9 = arith.constant 1 : i32
    %c0_i32_10 = arith.constant 0 : i32
    %29 = tpu.memref_slice %arg5[%24, %c0_i32_10] : memref<512x32xf32, #tpu.memory_space<any>> -> memref<1x32xf32, #tpu.memory_space<any>>
    %c0_i32_11 = arith.constant 0 : i32
    %30 = tpu.memref_slice %arg11[%c1_i32_5, %c0_i32_11] : memref<8x32xf32, #tpu.memory_space<vmem>> -> memref<1x32xf32, #tpu.memory_space<vmem>>
    %31 = tpu.memref_slice %arg12[%c1_i32_9, %c1_i32_5] : memref<2x8x!tpu.dma_semaphore, #tpu.memory_space<semaphore_mem>> -> memref<1x1x!tpu.dma_semaphore, #tpu.memory_space<semaphore_mem>>
    %32 = tpu.memref_squeeze %31 : memref<1x1x!tpu.dma_semaphore, #tpu.memory_space<semaphore_mem>> -> memref<!tpu.dma_semaphore, #tpu.memory_space<semaphore_mem>>
    tpu.enqueue_dma source(%29 : memref<1x32xf32, #tpu.memory_space<any>>) target(%30 : memref<1x32xf32, #tpu.memory_space<vmem>>) target_semaphore(%32 : memref<!tpu.dma_semaphore, #tpu.memory_space<semaphore_mem>>)
    %c2_i32 = arith.constant 2 : i32
    %33 = arith.addi %0, %c2_i32 : i32
    %34 = arith.index_cast %arg0 : i32 to index
    %35 = arith.index_cast %33 : i32 to index
    %36 = memref.load %arg2[%34, %35] : memref<2x8xi32, #tpu.memory_space<smem>>
    %37 = arith.addi %0, %c2_i32 : i32
    %38 = arith.index_cast %arg0 : i32 to index
    %39 = arith.index_cast %37 : i32 to index
    %40 = memref.load %arg3[%38, %39] : memref<2x8xi32, #tpu.memory_space<smem>>
    %c0_i32_12 = arith.constant 0 : i32
    %c0_i32_13 = arith.constant 0 : i32
    %41 = tpu.memref_slice %arg4[%36, %c0_i32_13] : memref<512x32xf32, #tpu.memory_space<any>> -> memref<1x32xf32, #tpu.memory_space<any>>
    %c0_i32_14 = arith.constant 0 : i32
    %42 = tpu.memref_slice %arg10[%c2_i32, %c0_i32_14] : memref<8x32xf32, #tpu.memory_space<vmem>> -> memref<1x32xf32, #tpu.memory_space<vmem>>
    %43 = tpu.memref_slice %arg12[%c0_i32_12, %c2_i32] : memref<2x8x!tpu.dma_semaphore, #tpu.memory_space<semaphore_mem>> -> memref<1x1x!tpu.dma_semaphore, #tpu.memory_space<semaphore_mem>>
    %44 = tpu.memref_squeeze %43 : memref<1x1x!tpu.dma_semaphore, #tpu.memory_space<semaphore_mem>> -> memref<!tpu.dma_semaphore, #tpu.memory_space<semaphore_mem>>
    tpu.enqueue_dma source(%41 : memref<1x32xf32, #tpu.memory_space<any>>) target(%42 : memref<1x32xf32, #tpu.memory_space<vmem>>) target_semaphore(%44 : memref<!tpu.dma_semaphore, #tpu.memory_space<semaphore_mem>>)
    %c1_i32_15 = arith.constant 1 : i32
    %c0_i32_16 = arith.constant 0 : i32
    %45 = tpu.memref_slice %arg5[%40, %c0_i32_16] : memref<512x32xf32, #tpu.memory_space<any>> -> memref<1x32xf32, #tpu.memory_space<any>>
    %c0_i32_17 = arith.constant 0 : i32
    %46 = tpu.memref_slice %arg11[%c2_i32, %c0_i32_17] : memref<8x32xf32, #tpu.memory_space<vmem>> -> memref<1x32xf32, #tpu.memory_space<vmem>>
    %47 = tpu.memref_slice %arg12[%c1_i32_15, %c2_i32] : memref<2x8x!tpu.dma_semaphore, #tpu.memory_space<semaphore_mem>> -> memref<1x1x!tpu.dma_semaphore, #tpu.memory_space<semaphore_mem>>
    %48 = tpu.memref_squeeze %47 : memref<1x1x!tpu.dma_semaphore, #tpu.memory_space<semaphore_mem>> -> memref<!tpu.dma_semaphore, #tpu.memory_space<semaphore_mem>>
    tpu.enqueue_dma source(%45 : memref<1x32xf32, #tpu.memory_space<any>>) target(%46 : memref<1x32xf32, #tpu.memory_space<vmem>>) target_semaphore(%48 : memref<!tpu.dma_semaphore, #tpu.memory_space<semaphore_mem>>)
    %c3_i32 = arith.constant 3 : i32
    %49 = arith.addi %0, %c3_i32 : i32
    %50 = arith.index_cast %arg0 : i32 to index
    %51 = arith.index_cast %49 : i32 to index
    %52 = memref.load %arg2[%50, %51] : memref<2x8xi32, #tpu.memory_space<smem>>
    %53 = arith.addi %0, %c3_i32 : i32
    %54 = arith.index_cast %arg0 : i32 to index
    %55 = arith.index_cast %53 : i32 to index
    %56 = memref.load %arg3[%54, %55] : memref<2x8xi32, #tpu.memory_space<smem>>
    %c0_i32_18 = arith.constant 0 : i32
    %c0_i32_19 = arith.constant 0 : i32
    %57 = tpu.memref_slice %arg4[%52, %c0_i32_19] : memref<512x32xf32, #tpu.memory_space<any>> -> memref<1x32xf32, #tpu.memory_space<any>>
    %c0_i32_20 = arith.constant 0 : i32
    %58 = tpu.memref_slice %arg10[%c3_i32, %c0_i32_20] : memref<8x32xf32, #tpu.memory_space<vmem>> -> memref<1x32xf32, #tpu.memory_space<vmem>>
    %59 = tpu.memref_slice %arg12[%c0_i32_18, %c3_i32] : memref<2x8x!tpu.dma_semaphore, #tpu.memory_space<semaphore_mem>> -> memref<1x1x!tpu.dma_semaphore, #tpu.memory_space<semaphore_mem>>
    %60 = tpu.memref_squeeze %59 : memref<1x1x!tpu.dma_semaphore, #tpu.memory_space<semaphore_mem>> -> memref<!tpu.dma_semaphore, #tpu.memory_space<semaphore_mem>>
    tpu.enqueue_dma source(%57 : memref<1x32xf32, #tpu.memory_space<any>>) target(%58 : memref<1x32xf32, #tpu.memory_space<vmem>>) target_semaphore(%60 : memref<!tpu.dma_semaphore, #tpu.memory_space<semaphore_mem>>)
    %c1_i32_21 = arith.constant 1 : i32
    %c0_i32_22 = arith.constant 0 : i32
    %61 = tpu.memref_slice %arg5[%56, %c0_i32_22] : memref<512x32xf32, #tpu.memory_space<any>> -> memref<1x32xf32, #tpu.memory_space<any>>
    %c0_i32_23 = arith.constant 0 : i32
    %62 = tpu.memref_slice %arg11[%c3_i32, %c0_i32_23] : memref<8x32xf32, #tpu.memory_space<vmem>> -> memref<1x32xf32, #tpu.memory_space<vmem>>
    %63 = tpu.memref_slice %arg12[%c1_i32_21, %c3_i32] : memref<2x8x!tpu.dma_semaphore, #tpu.memory_space<semaphore_mem>> -> memref<1x1x!tpu.dma_semaphore, #tpu.memory_space<semaphore_mem>>
    %64 = tpu.memref_squeeze %63 : memref<1x1x!tpu.dma_semaphore, #tpu.memory_space<semaphore_mem>> -> memref<!tpu.dma_semaphore, #tpu.memory_space<semaphore_mem>>
    tpu.enqueue_dma source(%61 : memref<1x32xf32, #tpu.memory_space<any>>) target(%62 : memref<1x32xf32, #tpu.memory_space<vmem>>) target_semaphore(%64 : memref<!tpu.dma_semaphore, #tpu.memory_space<semaphore_mem>>)
    %c4_i32 = arith.constant 4 : i32
    %65 = arith.addi %0, %c4_i32 : i32
    %66 = arith.index_cast %arg0 : i32 to index
    %67 = arith.index_cast %65 : i32 to index
    %68 = memref.load %arg2[%66, %67] : memref<2x8xi32, #tpu.memory_space<smem>>
    %69 = arith.addi %0, %c4_i32 : i32
    %70 = arith.index_cast %arg0 : i32 to index
    %71 = arith.index_cast %69 : i32 to index
    %72 = memref.load %arg3[%70, %71] : memref<2x8xi32, #tpu.memory_space<smem>>
    %c0_i32_24 = arith.constant 0 : i32
    %c0_i32_25 = arith.constant 0 : i32
    %73 = tpu.memref_slice %arg4[%68, %c0_i32_25] : memref<512x32xf32, #tpu.memory_space<any>> -> memref<1x32xf32, #tpu.memory_space<any>>
    %c0_i32_26 = arith.constant 0 : i32
    %74 = tpu.memref_slice %arg10[%c4_i32, %c0_i32_26] : memref<8x32xf32, #tpu.memory_space<vmem>> -> memref<1x32xf32, #tpu.memory_space<vmem>>
    %75 = tpu.memref_slice %arg12[%c0_i32_24, %c4_i32] : memref<2x8x!tpu.dma_semaphore, #tpu.memory_space<semaphore_mem>> -> memref<1x1x!tpu.dma_semaphore, #tpu.memory_space<semaphore_mem>>
    %76 = tpu.memref_squeeze %75 : memref<1x1x!tpu.dma_semaphore, #tpu.memory_space<semaphore_mem>> -> memref<!tpu.dma_semaphore, #tpu.memory_space<semaphore_mem>>
    tpu.enqueue_dma source(%73 : memref<1x32xf32, #tpu.memory_space<any>>) target(%74 : memref<1x32xf32, #tpu.memory_space<vmem>>) target_semaphore(%76 : memref<!tpu.dma_semaphore, #tpu.memory_space<semaphore_mem>>)
    %c1_i32_27 = arith.constant 1 : i32
    %c0_i32_28 = arith.constant 0 : i32
    %77 = tpu.memref_slice %arg5[%72, %c0_i32_28] : memref<512x32xf32, #tpu.memory_space<any>> -> memref<1x32xf32, #tpu.memory_space<any>>
    %c0_i32_29 = arith.constant 0 : i32
    %78 = tpu.memref_slice %arg11[%c4_i32, %c0_i32_29] : memref<8x32xf32, #tpu.memory_space<vmem>> -> memref<1x32xf32, #tpu.memory_space<vmem>>
    %79 = tpu.memref_slice %arg12[%c1_i32_27, %c4_i32] : memref<2x8x!tpu.dma_semaphore, #tpu.memory_space<semaphore_mem>> -> memref<1x1x!tpu.dma_semaphore, #tpu.memory_space<semaphore_mem>>
    %80 = tpu.memref_squeeze %79 : memref<1x1x!tpu.dma_semaphore, #tpu.memory_space<semaphore_mem>> -> memref<!tpu.dma_semaphore, #tpu.memory_space<semaphore_mem>>
    tpu.enqueue_dma source(%77 : memref<1x32xf32, #tpu.memory_space<any>>) target(%78 : memref<1x32xf32, #tpu.memory_space<vmem>>) target_semaphore(%80 : memref<!tpu.dma_semaphore, #tpu.memory_space<semaphore_mem>>)
    %c5_i32 = arith.constant 5 : i32
    %81 = arith.addi %0, %c5_i32 : i32
    %82 = arith.index_cast %arg0 : i32 to index
    %83 = arith.index_cast %81 : i32 to index
    %84 = memref.load %arg2[%82, %83] : memref<2x8xi32, #tpu.memory_space<smem>>
    %85 = arith.addi %0, %c5_i32 : i32
    %86 = arith.index_cast %arg0 : i32 to index
    %87 = arith.index_cast %85 : i32 to index
    %88 = memref.load %arg3[%86, %87] : memref<2x8xi32, #tpu.memory_space<smem>>
    %c0_i32_30 = arith.constant 0 : i32
    %c0_i32_31 = arith.constant 0 : i32
    %89 = tpu.memref_slice %arg4[%84, %c0_i32_31] : memref<512x32xf32, #tpu.memory_space<any>> -> memref<1x32xf32, #tpu.memory_space<any>>
    %c0_i32_32 = arith.constant 0 : i32
    %90 = tpu.memref_slice %arg10[%c5_i32, %c0_i32_32] : memref<8x32xf32, #tpu.memory_space<vmem>> -> memref<1x32xf32, #tpu.memory_space<vmem>>
    %91 = tpu.memref_slice %arg12[%c0_i32_30, %c5_i32] : memref<2x8x!tpu.dma_semaphore, #tpu.memory_space<semaphore_mem>> -> memref<1x1x!tpu.dma_semaphore, #tpu.memory_space<semaphore_mem>>
    %92 = tpu.memref_squeeze %91 : memref<1x1x!tpu.dma_semaphore, #tpu.memory_space<semaphore_mem>> -> memref<!tpu.dma_semaphore, #tpu.memory_space<semaphore_mem>>
    tpu.enqueue_dma source(%89 : memref<1x32xf32, #tpu.memory_space<any>>) target(%90 : memref<1x32xf32, #tpu.memory_space<vmem>>) target_semaphore(%92 : memref<!tpu.dma_semaphore, #tpu.memory_space<semaphore_mem>>)
    %c1_i32_33 = arith.constant 1 : i32
    %c0_i32_34 = arith.constant 0 : i32
    %93 = tpu.memref_slice %arg5[%88, %c0_i32_34] : memref<512x32xf32, #tpu.memory_space<any>> -> memref<1x32xf32, #tpu.memory_space<any>>
    %c0_i32_35 = arith.constant 0 : i32
    %94 = tpu.memref_slice %arg11[%c5_i32, %c0_i32_35] : memref<8x32xf32, #tpu.memory_space<vmem>> -> memref<1x32xf32, #tpu.memory_space<vmem>>
    %95 = tpu.memref_slice %arg12[%c1_i32_33, %c5_i32] : memref<2x8x!tpu.dma_semaphore, #tpu.memory_space<semaphore_mem>> -> memref<1x1x!tpu.dma_semaphore, #tpu.memory_space<semaphore_mem>>
    %96 = tpu.memref_squeeze %95 : memref<1x1x!tpu.dma_semaphore, #tpu.memory_space<semaphore_mem>> -> memref<!tpu.dma_semaphore, #tpu.memory_space<semaphore_mem>>
    tpu.enqueue_dma source(%93 : memref<1x32xf32, #tpu.memory_space<any>>) target(%94 : memref<1x32xf32, #tpu.memory_space<vmem>>) target_semaphore(%96 : memref<!tpu.dma_semaphore, #tpu.memory_space<semaphore_mem>>)
    %c6_i32 = arith.constant 6 : i32
    %97 = arith.addi %0, %c6_i32 : i32
    %98 = arith.index_cast %arg0 : i32 to index
    %99 = arith.index_cast %97 : i32 to index
    %100 = memref.load %arg2[%98, %99] : memref<2x8xi32, #tpu.memory_space<smem>>
    %101 = arith.addi %0, %c6_i32 : i32
    %102 = arith.index_cast %arg0 : i32 to index
    %103 = arith.index_cast %101 : i32 to index
    %104 = memref.load %arg3[%102, %103] : memref<2x8xi32, #tpu.memory_space<smem>>
    %c0_i32_36 = arith.constant 0 : i32
    %c0_i32_37 = arith.constant 0 : i32
    %105 = tpu.memref_slice %arg4[%100, %c0_i32_37] : memref<512x32xf32, #tpu.memory_space<any>> -> memref<1x32xf32, #tpu.memory_space<any>>
    %c0_i32_38 = arith.constant 0 : i32
    %106 = tpu.memref_slice %arg10[%c6_i32, %c0_i32_38] : memref<8x32xf32, #tpu.memory_space<vmem>> -> memref<1x32xf32, #tpu.memory_space<vmem>>
    %107 = tpu.memref_slice %arg12[%c0_i32_36, %c6_i32] : memref<2x8x!tpu.dma_semaphore, #tpu.memory_space<semaphore_mem>> -> memref<1x1x!tpu.dma_semaphore, #tpu.memory_space<semaphore_mem>>
    %108 = tpu.memref_squeeze %107 : memref<1x1x!tpu.dma_semaphore, #tpu.memory_space<semaphore_mem>> -> memref<!tpu.dma_semaphore, #tpu.memory_space<semaphore_mem>>
    tpu.enqueue_dma source(%105 : memref<1x32xf32, #tpu.memory_space<any>>) target(%106 : memref<1x32xf32, #tpu.memory_space<vmem>>) target_semaphore(%108 : memref<!tpu.dma_semaphore, #tpu.memory_space<semaphore_mem>>)
    %c1_i32_39 = arith.constant 1 : i32
    %c0_i32_40 = arith.constant 0 : i32
    %109 = tpu.memref_slice %arg5[%104, %c0_i32_40] : memref<512x32xf32, #tpu.memory_space<any>> -> memref<1x32xf32, #tpu.memory_space<any>>
    %c0_i32_41 = arith.constant 0 : i32
    %110 = tpu.memref_slice %arg11[%c6_i32, %c0_i32_41] : memref<8x32xf32, #tpu.memory_space<vmem>> -> memref<1x32xf32, #tpu.memory_space<vmem>>
    %111 = tpu.memref_slice %arg12[%c1_i32_39, %c6_i32] : memref<2x8x!tpu.dma_semaphore, #tpu.memory_space<semaphore_mem>> -> memref<1x1x!tpu.dma_semaphore, #tpu.memory_space<semaphore_mem>>
    %112 = tpu.memref_squeeze %111 : memref<1x1x!tpu.dma_semaphore, #tpu.memory_space<semaphore_mem>> -> memref<!tpu.dma_semaphore, #tpu.memory_space<semaphore_mem>>
    tpu.enqueue_dma source(%109 : memref<1x32xf32, #tpu.memory_space<any>>) target(%110 : memref<1x32xf32, #tpu.memory_space<vmem>>) target_semaphore(%112 : memref<!tpu.dma_semaphore, #tpu.memory_space<semaphore_mem>>)
    %c7_i32 = arith.constant 7 : i32
    %113 = arith.addi %0, %c7_i32 : i32
    %114 = arith.index_cast %arg0 : i32 to index
    %115 = arith.index_cast %113 : i32 to index
    %116 = memref.load %arg2[%114, %115] : memref<2x8xi32, #tpu.memory_space<smem>>
    %117 = arith.addi %0, %c7_i32 : i32
    %118 = arith.index_cast %arg0 : i32 to index
    %119 = arith.index_cast %117 : i32 to index
    %120 = memref.load %arg3[%118, %119] : memref<2x8xi32, #tpu.memory_space<smem>>
    %c0_i32_42 = arith.constant 0 : i32
    %c0_i32_43 = arith.constant 0 : i32
    %121 = tpu.memref_slice %arg4[%116, %c0_i32_43] : memref<512x32xf32, #tpu.memory_space<any>> -> memref<1x32xf32, #tpu.memory_space<any>>
    %c0_i32_44 = arith.constant 0 : i32
    %122 = tpu.memref_slice %arg10[%c7_i32, %c0_i32_44] : memref<8x32xf32, #tpu.memory_space<vmem>> -> memref<1x32xf32, #tpu.memory_space<vmem>>
    %123 = tpu.memref_slice %arg12[%c0_i32_42, %c7_i32] : memref<2x8x!tpu.dma_semaphore, #tpu.memory_space<semaphore_mem>> -> memref<1x1x!tpu.dma_semaphore, #tpu.memory_space<semaphore_mem>>
    %124 = tpu.memref_squeeze %123 : memref<1x1x!tpu.dma_semaphore, #tpu.memory_space<semaphore_mem>> -> memref<!tpu.dma_semaphore, #tpu.memory_space<semaphore_mem>>
    tpu.enqueue_dma source(%121 : memref<1x32xf32, #tpu.memory_space<any>>) target(%122 : memref<1x32xf32, #tpu.memory_space<vmem>>) target_semaphore(%124 : memref<!tpu.dma_semaphore, #tpu.memory_space<semaphore_mem>>)
    %c1_i32_45 = arith.constant 1 : i32
    %c0_i32_46 = arith.constant 0 : i32
    %125 = tpu.memref_slice %arg5[%120, %c0_i32_46] : memref<512x32xf32, #tpu.memory_space<any>> -> memref<1x32xf32, #tpu.memory_space<any>>
    %c0_i32_47 = arith.constant 0 : i32
    %126 = tpu.memref_slice %arg11[%c7_i32, %c0_i32_47] : memref<8x32xf32, #tpu.memory_space<vmem>> -> memref<1x32xf32, #tpu.memory_space<vmem>>
    %127 = tpu.memref_slice %arg12[%c1_i32_45, %c7_i32] : memref<2x8x!tpu.dma_semaphore, #tpu.memory_space<semaphore_mem>> -> memref<1x1x!tpu.dma_semaphore, #tpu.memory_space<semaphore_mem>>
    %128 = tpu.memref_squeeze %127 : memref<1x1x!tpu.dma_semaphore, #tpu.memory_space<semaphore_mem>> -> memref<!tpu.dma_semaphore, #tpu.memory_space<semaphore_mem>>
    tpu.enqueue_dma source(%125 : memref<1x32xf32, #tpu.memory_space<any>>) target(%126 : memref<1x32xf32, #tpu.memory_space<vmem>>) target_semaphore(%128 : memref<!tpu.dma_semaphore, #tpu.memory_space<semaphore_mem>>)
    %c8_i32_48 = arith.constant 8 : i32
    %c0_i32_49 = arith.constant 0 : i32
    %c0_i32_50 = arith.constant 0 : i32
    %c0_i32_51 = arith.constant 0 : i32
    %c0_i32_52 = arith.constant 0 : i32
    %129 = tpu.memref_slice %arg4[%c0_i32_51, %c0_i32_52] : memref<512x32xf32, #tpu.memory_space<any>> -> memref<1x32xf32, #tpu.memory_space<any>>
    %c0_i32_53 = arith.constant 0 : i32
    %130 = tpu.memref_slice %arg10[%c0_i32_49, %c0_i32_53] : memref<8x32xf32, #tpu.memory_space<vmem>> -> memref<1x32xf32, #tpu.memory_space<vmem>>
    %131 = tpu.memref_slice %arg12[%c0_i32_50, %c0_i32_49] : memref<2x8x!tpu.dma_semaphore, #tpu.memory_space<semaphore_mem>> -> memref<1x1x!tpu.dma_semaphore, #tpu.memory_space<semaphore_mem>>
    %132 = tpu.memref_squeeze %131 : memref<1x1x!tpu.dma_semaphore, #tpu.memory_space<semaphore_mem>> -> memref<!tpu.dma_semaphore, #tpu.memory_space<semaphore_mem>>
    tpu.wait_dma2 semaphore(%132 : memref<!tpu.dma_semaphore, #tpu.memory_space<semaphore_mem>>) src(%129 : memref<1x32xf32, #tpu.memory_space<any>>) dst(%130 : memref<1x32xf32, #tpu.memory_space<vmem>>)
    %c1_i32_54 = arith.constant 1 : i32
    %c0_i32_55 = arith.constant 0 : i32
    %c0_i32_56 = arith.constant 0 : i32
    %133 = tpu.memref_slice %arg5[%c0_i32_55, %c0_i32_56] : memref<512x32xf32, #tpu.memory_space<any>> -> memref<1x32xf32, #tpu.memory_space<any>>
    %c0_i32_57 = arith.constant 0 : i32
    %134 = tpu.memref_slice %arg11[%c0_i32_49, %c0_i32_57] : memref<8x32xf32, #tpu.memory_space<vmem>> -> memref<1x32xf32, #tpu.memory_space<vmem>>
    %135 = tpu.memref_slice %arg12[%c1_i32_54, %c0_i32_49] : memref<2x8x!tpu.dma_semaphore, #tpu.memory_space<semaphore_mem>> -> memref<1x1x!tpu.dma_semaphore, #tpu.memory_space<semaphore_mem>>
    %136 = tpu.memref_squeeze %135 : memref<1x1x!tpu.dma_semaphore, #tpu.memory_space<semaphore_mem>> -> memref<!tpu.dma_semaphore, #tpu.memory_space<semaphore_mem>>
    tpu.wait_dma2 semaphore(%136 : memref<!tpu.dma_semaphore, #tpu.memory_space<semaphore_mem>>) src(%133 : memref<1x32xf32, #tpu.memory_space<any>>) dst(%134 : memref<1x32xf32, #tpu.memory_space<vmem>>)
    %c1_i32_58 = arith.constant 1 : i32
    %c0_i32_59 = arith.constant 0 : i32
    %c0_i32_60 = arith.constant 0 : i32
    %c0_i32_61 = arith.constant 0 : i32
    %137 = tpu.memref_slice %arg4[%c0_i32_60, %c0_i32_61] : memref<512x32xf32, #tpu.memory_space<any>> -> memref<1x32xf32, #tpu.memory_space<any>>
    %c0_i32_62 = arith.constant 0 : i32
    %138 = tpu.memref_slice %arg10[%c1_i32_58, %c0_i32_62] : memref<8x32xf32, #tpu.memory_space<vmem>> -> memref<1x32xf32, #tpu.memory_space<vmem>>
    %139 = tpu.memref_slice %arg12[%c0_i32_59, %c1_i32_58] : memref<2x8x!tpu.dma_semaphore, #tpu.memory_space<semaphore_mem>> -> memref<1x1x!tpu.dma_semaphore, #tpu.memory_space<semaphore_mem>>
    %140 = tpu.memref_squeeze %139 : memref<1x1x!tpu.dma_semaphore, #tpu.memory_space<semaphore_mem>> -> memref<!tpu.dma_semaphore, #tpu.memory_space<semaphore_mem>>
    tpu.wait_dma2 semaphore(%140 : memref<!tpu.dma_semaphore, #tpu.memory_space<semaphore_mem>>) src(%137 : memref<1x32xf32, #tpu.memory_space<any>>) dst(%138 : memref<1x32xf32, #tpu.memory_space<vmem>>)
    %c1_i32_63 = arith.constant 1 : i32
    %c0_i32_64 = arith.constant 0 : i32
    %c0_i32_65 = arith.constant 0 : i32
    %141 = tpu.memref_slice %arg5[%c0_i32_64, %c0_i32_65] : memref<512x32xf32, #tpu.memory_space<any>> -> memref<1x32xf32, #tpu.memory_space<any>>
    %c0_i32_66 = arith.constant 0 : i32
    %142 = tpu.memref_slice %arg11[%c1_i32_58, %c0_i32_66] : memref<8x32xf32, #tpu.memory_space<vmem>> -> memref<1x32xf32, #tpu.memory_space<vmem>>
    %143 = tpu.memref_slice %arg12[%c1_i32_63, %c1_i32_58] : memref<2x8x!tpu.dma_semaphore, #tpu.memory_space<semaphore_mem>> -> memref<1x1x!tpu.dma_semaphore, #tpu.memory_space<semaphore_mem>>
    %144 = tpu.memref_squeeze %143 : memref<1x1x!tpu.dma_semaphore, #tpu.memory_space<semaphore_mem>> -> memref<!tpu.dma_semaphore, #tpu.memory_space<semaphore_mem>>
    tpu.wait_dma2 semaphore(%144 : memref<!tpu.dma_semaphore, #tpu.memory_space<semaphore_mem>>) src(%141 : memref<1x32xf32, #tpu.memory_space<any>>) dst(%142 : memref<1x32xf32, #tpu.memory_space<vmem>>)
    %c2_i32_67 = arith.constant 2 : i32
    %c0_i32_68 = arith.constant 0 : i32
    %c0_i32_69 = arith.constant 0 : i32
    %c0_i32_70 = arith.constant 0 : i32
    %145 = tpu.memref_slice %arg4[%c0_i32_69, %c0_i32_70] : memref<512x32xf32, #tpu.memory_space<any>> -> memref<1x32xf32, #tpu.memory_space<any>>
    %c0_i32_71 = arith.constant 0 : i32
    %146 = tpu.memref_slice %arg10[%c2_i32_67, %c0_i32_71] : memref<8x32xf32, #tpu.memory_space<vmem>> -> memref<1x32xf32, #tpu.memory_space<vmem>>
    %147 = tpu.memref_slice %arg12[%c0_i32_68, %c2_i32_67] : memref<2x8x!tpu.dma_semaphore, #tpu.memory_space<semaphore_mem>> -> memref<1x1x!tpu.dma_semaphore, #tpu.memory_space<semaphore_mem>>
    %148 = tpu.memref_squeeze %147 : memref<1x1x!tpu.dma_semaphore, #tpu.memory_space<semaphore_mem>> -> memref<!tpu.dma_semaphore, #tpu.memory_space<semaphore_mem>>
    tpu.wait_dma2 semaphore(%148 : memref<!tpu.dma_semaphore, #tpu.memory_space<semaphore_mem>>) src(%145 : memref<1x32xf32, #tpu.memory_space<any>>) dst(%146 : memref<1x32xf32, #tpu.memory_space<vmem>>)
    %c1_i32_72 = arith.constant 1 : i32
    %c0_i32_73 = arith.constant 0 : i32
    %c0_i32_74 = arith.constant 0 : i32
    %149 = tpu.memref_slice %arg5[%c0_i32_73, %c0_i32_74] : memref<512x32xf32, #tpu.memory_space<any>> -> memref<1x32xf32, #tpu.memory_space<any>>
    %c0_i32_75 = arith.constant 0 : i32
    %150 = tpu.memref_slice %arg11[%c2_i32_67, %c0_i32_75] : memref<8x32xf32, #tpu.memory_space<vmem>> -> memref<1x32xf32, #tpu.memory_space<vmem>>
    %151 = tpu.memref_slice %arg12[%c1_i32_72, %c2_i32_67] : memref<2x8x!tpu.dma_semaphore, #tpu.memory_space<semaphore_mem>> -> memref<1x1x!tpu.dma_semaphore, #tpu.memory_space<semaphore_mem>>
    %152 = tpu.memref_squeeze %151 : memref<1x1x!tpu.dma_semaphore, #tpu.memory_space<semaphore_mem>> -> memref<!tpu.dma_semaphore, #tpu.memory_space<semaphore_mem>>
    tpu.wait_dma2 semaphore(%152 : memref<!tpu.dma_semaphore, #tpu.memory_space<semaphore_mem>>) src(%149 : memref<1x32xf32, #tpu.memory_space<any>>) dst(%150 : memref<1x32xf32, #tpu.memory_space<vmem>>)
    %c3_i32_76 = arith.constant 3 : i32
    %c0_i32_77 = arith.constant 0 : i32
    %c0_i32_78 = arith.constant 0 : i32
    %c0_i32_79 = arith.constant 0 : i32
    %153 = tpu.memref_slice %arg4[%c0_i32_78, %c0_i32_79] : memref<512x32xf32, #tpu.memory_space<any>> -> memref<1x32xf32, #tpu.memory_space<any>>
    %c0_i32_80 = arith.constant 0 : i32
    %154 = tpu.memref_slice %arg10[%c3_i32_76, %c0_i32_80] : memref<8x32xf32, #tpu.memory_space<vmem>> -> memref<1x32xf32, #tpu.memory_space<vmem>>
    %155 = tpu.memref_slice %arg12[%c0_i32_77, %c3_i32_76] : memref<2x8x!tpu.dma_semaphore, #tpu.memory_space<semaphore_mem>> -> memref<1x1x!tpu.dma_semaphore, #tpu.memory_space<semaphore_mem>>
    %156 = tpu.memref_squeeze %155 : memref<1x1x!tpu.dma_semaphore, #tpu.memory_space<semaphore_mem>> -> memref<!tpu.dma_semaphore, #tpu.memory_space<semaphore_mem>>
    tpu.wait_dma2 semaphore(%156 : memref<!tpu.dma_semaphore, #tpu.memory_space<semaphore_mem>>) src(%153 : memref<1x32xf32, #tpu.memory_space<any>>) dst(%154 : memref<1x32xf32, #tpu.memory_space<vmem>>)
    %c1_i32_81 = arith.constant 1 : i32
    %c0_i32_82 = arith.constant 0 : i32
    %c0_i32_83 = arith.constant 0 : i32
    %157 = tpu.memref_slice %arg5[%c0_i32_82, %c0_i32_83] : memref<512x32xf32, #tpu.memory_space<any>> -> memref<1x32xf32, #tpu.memory_space<any>>
    %c0_i32_84 = arith.constant 0 : i32
    %158 = tpu.memref_slice %arg11[%c3_i32_76, %c0_i32_84] : memref<8x32xf32, #tpu.memory_space<vmem>> -> memref<1x32xf32, #tpu.memory_space<vmem>>
    %159 = tpu.memref_slice %arg12[%c1_i32_81, %c3_i32_76] : memref<2x8x!tpu.dma_semaphore, #tpu.memory_space<semaphore_mem>> -> memref<1x1x!tpu.dma_semaphore, #tpu.memory_space<semaphore_mem>>
    %160 = tpu.memref_squeeze %159 : memref<1x1x!tpu.dma_semaphore, #tpu.memory_space<semaphore_mem>> -> memref<!tpu.dma_semaphore, #tpu.memory_space<semaphore_mem>>
    tpu.wait_dma2 semaphore(%160 : memref<!tpu.dma_semaphore, #tpu.memory_space<semaphore_mem>>) src(%157 : memref<1x32xf32, #tpu.memory_space<any>>) dst(%158 : memref<1x32xf32, #tpu.memory_space<vmem>>)
    %c4_i32_85 = arith.constant 4 : i32
    %c0_i32_86 = arith.constant 0 : i32
    %c0_i32_87 = arith.constant 0 : i32
    %c0_i32_88 = arith.constant 0 : i32
    %161 = tpu.memref_slice %arg4[%c0_i32_87, %c0_i32_88] : memref<512x32xf32, #tpu.memory_space<any>> -> memref<1x32xf32, #tpu.memory_space<any>>
    %c0_i32_89 = arith.constant 0 : i32
    %162 = tpu.memref_slice %arg10[%c4_i32_85, %c0_i32_89] : memref<8x32xf32, #tpu.memory_space<vmem>> -> memref<1x32xf32, #tpu.memory_space<vmem>>
    %163 = tpu.memref_slice %arg12[%c0_i32_86, %c4_i32_85] : memref<2x8x!tpu.dma_semaphore, #tpu.memory_space<semaphore_mem>> -> memref<1x1x!tpu.dma_semaphore, #tpu.memory_space<semaphore_mem>>
    %164 = tpu.memref_squeeze %163 : memref<1x1x!tpu.dma_semaphore, #tpu.memory_space<semaphore_mem>> -> memref<!tpu.dma_semaphore, #tpu.memory_space<semaphore_mem>>
    tpu.wait_dma2 semaphore(%164 : memref<!tpu.dma_semaphore, #tpu.memory_space<semaphore_mem>>) src(%161 : memref<1x32xf32, #tpu.memory_space<any>>) dst(%162 : memref<1x32xf32, #tpu.memory_space<vmem>>)
    %c1_i32_90 = arith.constant 1 : i32
    %c0_i32_91 = arith.constant 0 : i32
    %c0_i32_92 = arith.constant 0 : i32
    %165 = tpu.memref_slice %arg5[%c0_i32_91, %c0_i32_92] : memref<512x32xf32, #tpu.memory_space<any>> -> memref<1x32xf32, #tpu.memory_space<any>>
    %c0_i32_93 = arith.constant 0 : i32
    %166 = tpu.memref_slice %arg11[%c4_i32_85, %c0_i32_93] : memref<8x32xf32, #tpu.memory_space<vmem>> -> memref<1x32xf32, #tpu.memory_space<vmem>>
    %167 = tpu.memref_slice %arg12[%c1_i32_90, %c4_i32_85] : memref<2x8x!tpu.dma_semaphore, #tpu.memory_space<semaphore_mem>> -> memref<1x1x!tpu.dma_semaphore, #tpu.memory_space<semaphore_mem>>
    %168 = tpu.memref_squeeze %167 : memref<1x1x!tpu.dma_semaphore, #tpu.memory_space<semaphore_mem>> -> memref<!tpu.dma_semaphore, #tpu.memory_space<semaphore_mem>>
    tpu.wait_dma2 semaphore(%168 : memref<!tpu.dma_semaphore, #tpu.memory_space<semaphore_mem>>) src(%165 : memref<1x32xf32, #tpu.memory_space<any>>) dst(%166 : memref<1x32xf32, #tpu.memory_space<vmem>>)
    %c5_i32_94 = arith.constant 5 : i32
    %c0_i32_95 = arith.constant 0 : i32
    %c0_i32_96 = arith.constant 0 : i32
    %c0_i32_97 = arith.constant 0 : i32
    %169 = tpu.memref_slice %arg4[%c0_i32_96, %c0_i32_97] : memref<512x32xf32, #tpu.memory_space<any>> -> memref<1x32xf32, #tpu.memory_space<any>>
    %c0_i32_98 = arith.constant 0 : i32
    %170 = tpu.memref_slice %arg10[%c5_i32_94, %c0_i32_98] : memref<8x32xf32, #tpu.memory_space<vmem>> -> memref<1x32xf32, #tpu.memory_space<vmem>>
    %171 = tpu.memref_slice %arg12[%c0_i32_95, %c5_i32_94] : memref<2x8x!tpu.dma_semaphore, #tpu.memory_space<semaphore_mem>> -> memref<1x1x!tpu.dma_semaphore, #tpu.memory_space<semaphore_mem>>
    %172 = tpu.memref_squeeze %171 : memref<1x1x!tpu.dma_semaphore, #tpu.memory_space<semaphore_mem>> -> memref<!tpu.dma_semaphore, #tpu.memory_space<semaphore_mem>>
    tpu.wait_dma2 semaphore(%172 : memref<!tpu.dma_semaphore, #tpu.memory_space<semaphore_mem>>) src(%169 : memref<1x32xf32, #tpu.memory_space<any>>) dst(%170 : memref<1x32xf32, #tpu.memory_space<vmem>>)
    %c1_i32_99 = arith.constant 1 : i32
    %c0_i32_100 = arith.constant 0 : i32
    %c0_i32_101 = arith.constant 0 : i32
    %173 = tpu.memref_slice %arg5[%c0_i32_100, %c0_i32_101] : memref<512x32xf32, #tpu.memory_space<any>> -> memref<1x32xf32, #tpu.memory_space<any>>
    %c0_i32_102 = arith.constant 0 : i32
    %174 = tpu.memref_slice %arg11[%c5_i32_94, %c0_i32_102] : memref<8x32xf32, #tpu.memory_space<vmem>> -> memref<1x32xf32, #tpu.memory_space<vmem>>
    %175 = tpu.memref_slice %arg12[%c1_i32_99, %c5_i32_94] : memref<2x8x!tpu.dma_semaphore, #tpu.memory_space<semaphore_mem>> -> memref<1x1x!tpu.dma_semaphore, #tpu.memory_space<semaphore_mem>>
    %176 = tpu.memref_squeeze %175 : memref<1x1x!tpu.dma_semaphore, #tpu.memory_space<semaphore_mem>> -> memref<!tpu.dma_semaphore, #tpu.memory_space<semaphore_mem>>
    tpu.wait_dma2 semaphore(%176 : memref<!tpu.dma_semaphore, #tpu.memory_space<semaphore_mem>>) src(%173 : memref<1x32xf32, #tpu.memory_space<any>>) dst(%174 : memref<1x32xf32, #tpu.memory_space<vmem>>)
    %c6_i32_103 = arith.constant 6 : i32
    %c0_i32_104 = arith.constant 0 : i32
    %c0_i32_105 = arith.constant 0 : i32
    %c0_i32_106 = arith.constant 0 : i32
    %177 = tpu.memref_slice %arg4[%c0_i32_105, %c0_i32_106] : memref<512x32xf32, #tpu.memory_space<any>> -> memref<1x32xf32, #tpu.memory_space<any>>
    %c0_i32_107 = arith.constant 0 : i32
    %178 = tpu.memref_slice %arg10[%c6_i32_103, %c0_i32_107] : memref<8x32xf32, #tpu.memory_space<vmem>> -> memref<1x32xf32, #tpu.memory_space<vmem>>
    %179 = tpu.memref_slice %arg12[%c0_i32_104, %c6_i32_103] : memref<2x8x!tpu.dma_semaphore, #tpu.memory_space<semaphore_mem>> -> memref<1x1x!tpu.dma_semaphore, #tpu.memory_space<semaphore_mem>>
    %180 = tpu.memref_squeeze %179 : memref<1x1x!tpu.dma_semaphore, #tpu.memory_space<semaphore_mem>> -> memref<!tpu.dma_semaphore, #tpu.memory_space<semaphore_mem>>
    tpu.wait_dma2 semaphore(%180 : memref<!tpu.dma_semaphore, #tpu.memory_space<semaphore_mem>>) src(%177 : memref<1x32xf32, #tpu.memory_space<any>>) dst(%178 : memref<1x32xf32, #tpu.memory_space<vmem>>)
    %c1_i32_108 = arith.constant 1 : i32
    %c0_i32_109 = arith.constant 0 : i32
    %c0_i32_110 = arith.constant 0 : i32
    %181 = tpu.memref_slice %arg5[%c0_i32_109, %c0_i32_110] : memref<512x32xf32, #tpu.memory_space<any>> -> memref<1x32xf32, #tpu.memory_space<any>>
    %c0_i32_111 = arith.constant 0 : i32
    %182 = tpu.memref_slice %arg11[%c6_i32_103, %c0_i32_111] : memref<8x32xf32, #tpu.memory_space<vmem>> -> memref<1x32xf32, #tpu.memory_space<vmem>>
    %183 = tpu.memref_slice %arg12[%c1_i32_108, %c6_i32_103] : memref<2x8x!tpu.dma_semaphore, #tpu.memory_space<semaphore_mem>> -> memref<1x1x!tpu.dma_semaphore, #tpu.memory_space<semaphore_mem>>
    %184 = tpu.memref_squeeze %183 : memref<1x1x!tpu.dma_semaphore, #tpu.memory_space<semaphore_mem>> -> memref<!tpu.dma_semaphore, #tpu.memory_space<semaphore_mem>>
    tpu.wait_dma2 semaphore(%184 : memref<!tpu.dma_semaphore, #tpu.memory_space<semaphore_mem>>) src(%181 : memref<1x32xf32, #tpu.memory_space<any>>) dst(%182 : memref<1x32xf32, #tpu.memory_space<vmem>>)
    %c7_i32_112 = arith.constant 7 : i32
    %c0_i32_113 = arith.constant 0 : i32
    %c0_i32_114 = arith.constant 0 : i32
    %c0_i32_115 = arith.constant 0 : i32
    %185 = tpu.memref_slice %arg4[%c0_i32_114, %c0_i32_115] : memref<512x32xf32, #tpu.memory_space<any>> -> memref<1x32xf32, #tpu.memory_space<any>>
    %c0_i32_116 = arith.constant 0 : i32
    %186 = tpu.memref_slice %arg10[%c7_i32_112, %c0_i32_116] : memref<8x32xf32, #tpu.memory_space<vmem>> -> memref<1x32xf32, #tpu.memory_space<vmem>>
    %187 = tpu.memref_slice %arg12[%c0_i32_113, %c7_i32_112] : memref<2x8x!tpu.dma_semaphore, #tpu.memory_space<semaphore_mem>> -> memref<1x1x!tpu.dma_semaphore, #tpu.memory_space<semaphore_mem>>
    %188 = tpu.memref_squeeze %187 : memref<1x1x!tpu.dma_semaphore, #tpu.memory_space<semaphore_mem>> -> memref<!tpu.dma_semaphore, #tpu.memory_space<semaphore_mem>>
    tpu.wait_dma2 semaphore(%188 : memref<!tpu.dma_semaphore, #tpu.memory_space<semaphore_mem>>) src(%185 : memref<1x32xf32, #tpu.memory_space<any>>) dst(%186 : memref<1x32xf32, #tpu.memory_space<vmem>>)
    %c1_i32_117 = arith.constant 1 : i32
    %c0_i32_118 = arith.constant 0 : i32
    %c0_i32_119 = arith.constant 0 : i32
    %189 = tpu.memref_slice %arg5[%c0_i32_118, %c0_i32_119] : memref<512x32xf32, #tpu.memory_space<any>> -> memref<1x32xf32, #tpu.memory_space<any>>
    %c0_i32_120 = arith.constant 0 : i32
    %190 = tpu.memref_slice %arg11[%c7_i32_112, %c0_i32_120] : memref<8x32xf32, #tpu.memory_space<vmem>> -> memref<1x32xf32, #tpu.memory_space<vmem>>
    %191 = tpu.memref_slice %arg12[%c1_i32_117, %c7_i32_112] : memref<2x8x!tpu.dma_semaphore, #tpu.memory_space<semaphore_mem>> -> memref<1x1x!tpu.dma_semaphore, #tpu.memory_space<semaphore_mem>>
    %192 = tpu.memref_squeeze %191 : memref<1x1x!tpu.dma_semaphore, #tpu.memory_space<semaphore_mem>> -> memref<!tpu.dma_semaphore, #tpu.memory_space<semaphore_mem>>
    tpu.wait_dma2 semaphore(%192 : memref<!tpu.dma_semaphore, #tpu.memory_space<semaphore_mem>>) src(%189 : memref<1x32xf32, #tpu.memory_space<any>>) dst(%190 : memref<1x32xf32, #tpu.memory_space<vmem>>)
    %c8_i32_121 = arith.constant 8 : i32
    %c0 = arith.constant 0 : index
    %c0_122 = arith.constant 0 : index
    %193 = vector.load %arg10[%c0, %c0_122] : memref<8x32xf32, #tpu.memory_space<vmem>>, vector<8x32xf32>
    %c0_123 = arith.constant 0 : index
    %c0_124 = arith.constant 0 : index
    %194 = vector.load %arg11[%c0_123, %c0_124] : memref<8x32xf32, #tpu.memory_space<vmem>>, vector<8x32xf32>
    %195 = arith.addf %193, %194 : vector<8x32xf32>
    %c0_125 = arith.constant 0 : index
    %c0_126 = arith.constant 0 : index
    %196 = vector.load %arg6[%c0_125, %c0_126] : memref<8x32xf32, #tpu.memory_space<vmem>>, vector<8x32xf32>
    %197 = arith.addf %195, %196 : vector<8x32xf32>
    %cst = arith.constant dense<0.000000e+00> : vector<8xf32>
    %198 = vector.multi_reduction <add>, %197, %cst [1] : vector<8x32xf32> to vector<8xf32>
    %199 = vector.shape_cast %198 : vector<8xf32> to vector<8x1xf32>
    %cst_127 = arith.constant 3.200000e+01 : f32
    %200 = vector.broadcast %cst_127 : f32 to vector<8x1xf32>
    %201 = arith.divf %199, %200 : vector<8x1xf32>
    %202 = vector.broadcast %201 : vector<8x1xf32> to vector<8x32xf32>
    %203 = arith.subf %197, %202 : vector<8x32xf32>
    %204 = arith.mulf %203, %203 : vector<8x32xf32>
    %cst_128 = arith.constant dense<0.000000e+00> : vector<8xf32>
    %205 = vector.multi_reduction <add>, %204, %cst_128 [1] : vector<8x32xf32> to vector<8xf32>
    %206 = vector.shape_cast %205 : vector<8xf32> to vector<8x1xf32>
    %cst_129 = arith.constant 3.200000e+01 : f32
    %207 = vector.broadcast %cst_129 : f32 to vector<8x1xf32>
    %208 = arith.divf %206, %207 : vector<8x1xf32>
    %cst_130 = arith.constant 9.99999996E-13 : f32
    %209 = vector.broadcast %cst_130 : f32 to vector<8x1xf32>
    %210 = arith.addf %208, %209 : vector<8x1xf32>
    %211 = math.rsqrt %210 : vector<8x1xf32>
    %212 = vector.broadcast %211 : vector<8x1xf32> to vector<8x32xf32>
    %213 = arith.mulf %203, %212 : vector<8x32xf32>
    %c0_131 = arith.constant 0 : index
    %c0_132 = arith.constant 0 : index
    %214 = vector.load %arg7[%c0_131, %c0_132] : memref<1x32xf32, #tpu.memory_space<vmem>>, vector<1x32xf32>
    %215 = vector.broadcast %214 : vector<1x32xf32> to vector<8x32xf32>
    %216 = arith.mulf %213, %215 : vector<8x32xf32>
    %c0_133 = arith.constant 0 : index
    %c0_134 = arith.constant 0 : index
    %217 = vector.load %arg8[%c0_133, %c0_134] : memref<1x32xf32, #tpu.memory_space<vmem>>, vector<1x32xf32>
    %218 = vector.broadcast %217 : vector<1x32xf32> to vector<8x32xf32>
    %219 = arith.addf %216, %218 : vector<8x32xf32>
    %c0_135 = arith.constant 0 : index
    %c0_136 = arith.constant 0 : index
    %c0_137 = arith.constant 0 : index
    %220 = vector.load %arg9[%c0_135, %c0_136, %c0_137] : memref<1x8x32xf32, #tpu.memory_space<vmem>>, vector<1x8x32xf32>
    %221 = vector.shape_cast %220 : vector<1x8x32xf32> to vector<8x32xf32>
    %222 = vector.shape_cast %219 : vector<8x32xf32> to vector<1x8x32xf32>
    tpu.vector_store %arg9[%c0_135, %c0_136, %c0_137], %222 {strides = array<i32>} : memref<1x8x32xf32, #tpu.memory_space<vmem>>, vector<1x8x32xf32>,
    return
  }
  func.func @transform_2(%arg0: i32, %arg1: i32, %arg2: memref<2x8xi32, #tpu.memory_space<smem>>, %arg3: memref<2x8xi32, #tpu.memory_space<smem>>) -> (i32, i32) {
    %c0_i32 = arith.constant 0 : i32
    %c0_i32_0 = arith.constant 0 : i32
    return %arg1, %c0_i32 : i32, i32
  }
  func.func @transform_3(%arg0: i32, %arg1: i32, %arg2: memref<2x8xi32, #tpu.memory_space<smem>>, %arg3: memref<2x8xi32, #tpu.memory_space<smem>>) -> (i32, i32) {
    %c0_i32 = arith.constant 0 : i32
    %c0_i32_0 = arith.constant 0 : i32
    %c0_i32_1 = arith.constant 0 : i32
    return %c0_i32, %c0_i32_0 : i32, i32
  }
  func.func @transform_4(%arg0: i32, %arg1: i32, %arg2: memref<2x8xi32, #tpu.memory_space<smem>>, %arg3: memref<2x8xi32, #tpu.memory_space<smem>>) -> (i32, i32) {
    %c0_i32 = arith.constant 0 : i32
    %c0_i32_0 = arith.constant 0 : i32
    %c0_i32_1 = arith.constant 0 : i32
    return %c0_i32, %c0_i32_0 : i32, i32
  }
  func.func @transform_5(%arg0: i32, %arg1: i32, %arg2: memref<2x8xi32, #tpu.memory_space<smem>>, %arg3: memref<2x8xi32, #tpu.memory_space<smem>>) -> (i32, i32, i32) {
    %c0_i32 = arith.constant 0 : i32
    %c0_i32_0 = arith.constant 0 : i32
    return %arg0, %arg1, %c0_i32 : i32, i32, i32
  }
}

</mosaic_0001>

<llo_original>
// kernel: tpu_custom_call.1
$region0: #{tpu_custom_call.1}
  #allocation0 [shape = 'u32[]', space=smem, size = 0x4, offset = 0x4, fixed_abs, tag = 'smem constant byte address 0x4 - core index']
  #allocation1 [shape = 'u32[72,128]{1,0:T(1,128)}', space=vmem, size = 0x9000, scoped, tag = 'internal scratch']
  #allocation2 [shape = 'f32[8,32]{1,0:T(8,128)}', space=vmem, size = 0x1000, scoped, tag = 'scratch operand']
  #allocation3 [shape = 'f32[8,32]{1,0:T(8,128)}', space=vmem, size = 0x1000, scoped, tag = 'scratch operand']
  #allocation4 [shape = 's32[16]{0}', space=sflag, size = 0x40, scoped, tag = 'scratch operand']
  #allocation5 [shape = 's32[1]{0}', space=sflag, size = 0x4, scoped, tag = 'scoped memory for tpu_custom_call.1']
  #allocation6 [shape = 'u8[1024]{0}', space=smem, size = 0x400, scoped, tag = 'prefetched SMEM operand 0']
  #allocation7 [shape = 'u8[1024]{0}', space=smem, size = 0x400, scoped, tag = 'prefetched SMEM operand 1']
  #allocation10 [shape = 's32[]', space=sflag, size = 0x4, offset = 0, fixed_abs, tag = 'sflag constant byte address 0x0 - dummy sync flag']
  #allocation11 [shape = 's32[]', space=sflag, size = 0x4, offset = 0, fixed_abs, tag = 'sflag constant byte address 0x0 - dummy sync flag']
  #allocation12 [shape = 's32[]', space=sflag, size = 0x4, offset = 0, fixed_abs, tag = 'sflag constant byte address 0x0 - dummy sync flag']
  #allocation13 [shape = 's32[]', space=sflag, size = 0x4, offset = 0, fixed_abs, tag = 'sflag constant byte address 0x0 - dummy sync flag']
  #allocation14 [shape = 's32[]', space=sflag, size = 0x4, offset = 0, fixed_abs, tag = 'sflag constant byte address 0x0 - dummy sync flag']
  #allocation15 [shape = 's32[]', space=sflag, size = 0x4, offset = 0, fixed_abs, tag = 'sflag constant byte address 0x0 - dummy sync flag']
  #allocation16 [shape = 's32[]', space=sflag, size = 0x4, offset = 0, fixed_abs, tag = 'sflag constant byte address 0x0 - dummy sync flag']
  #allocation17 [shape = 's32[]', space=sflag, size = 0x4, offset = 0, fixed_abs, tag = 'sflag constant byte address 0x0 - dummy sync flag']
  #allocation18 [shape = 's32[]', space=sflag, size = 0x4, offset = 0, fixed_abs, tag = 'sflag constant byte address 0x0 - dummy sync flag']
  #allocation19 [shape = 's32[]', space=sflag, size = 0x4, offset = 0, fixed_abs, tag = 'sflag constant byte address 0x0 - dummy sync flag']
  #allocation20 [shape = 's32[]', space=sflag, size = 0x4, offset = 0, fixed_abs, tag = 'sflag constant byte address 0x0 - dummy sync flag']
  #allocation21 [shape = 's32[]', space=sflag, size = 0x4, offset = 0, fixed_abs, tag = 'sflag constant byte address 0x0 - dummy sync flag']
  #allocation22 [shape = 's32[]', space=sflag, size = 0x4, offset = 0, fixed_abs, tag = 'sflag constant byte address 0x0 - dummy sync flag']
  #allocation23 [shape = 's32[]', space=sflag, size = 0x4, offset = 0, fixed_abs, tag = 'sflag constant byte address 0x0 - dummy sync flag']
  #allocation24 [shape = 's32[]', space=sflag, size = 0x4, offset = 0, fixed_abs, tag = 'sflag constant byte address 0x0 - dummy sync flag']
  #allocation25 [shape = 's32[]', space=sflag, size = 0x4, offset = 0, fixed_abs, tag = 'sflag constant byte address 0x0 - dummy sync flag']
  %s0 = inlined_call_operand.vmem [shape: s32[2,8], index: 0, kind: input, shape index: {}]
  %s1 = inlined_call_operand.vmem [shape: s32[2,8], index: 1, kind: input, shape index: {}]
  %s2 = inlined_call_operand.vmem [shape: f32[512,32], index: 2, kind: input, shape index: {}]
  %s3 = inlined_call_operand.vmem [shape: f32[512,32], index: 3, kind: input, shape index: {}]
  %s4 = inlined_call_operand.vmem [shape: f32[64,32], index: 4, kind: input, shape index: {}]
  %s5 = inlined_call_operand.vmem [shape: f32[1,32], index: 5, kind: input, shape index: {}]
  %s6 = inlined_call_operand.vmem [shape: f32[1,32], index: 6, kind: input, shape index: {}]
  %s7 = inlined_call_operand.hbm [shape: f32[2,8,32], index: 7, kind: output, shape index: {}]
  %s8 = sld [smem:[#allocation0]]
  $region525: #{tpu_custom_call.1} parent=0
    _
  %s10 = ssub.s32 1, %s8
  %s11 = scalar_select 0, %s10, %s8
  %s13 = sshll.u32 %s0, 4
  %s14 = int_to_ptr.vmem [resolvable:$true] %s13
  %16 = dma.vmem_to_smem %s14, 32, [#allocation6], [#allocation5]
  %s18 = sshll.u32 %s1, 4
  %s19 = int_to_ptr.vmem [resolvable:$true] %s18
  %21 = dma.vmem_to_smem %s19, 32, [#allocation7], [#allocation5]
  %23 = dma.done [#allocation5], 64
  %24 = sfence
  $region1: #{tpu_custom_call.1} parent=0
    #allocation8 [shape = 'u8[8192]{0}', space=vmem, size = 0x2000, scoped, tag = 'output window, operand 0']
    #allocation9 [shape = 's32[2]{0}', space=sflag, size = 0x8, scoped, tag = 'scoped memory for tpu_custom_call.1']
    %25 = vsyncpa [#allocation9], 0
    %s26 = scalar_lea.sflag [#allocation9], 1
    %27 = vsyncpa %s26, 0
    loop: start=0, step=1, limit=4
    $region2: #{tpu_custom_call.1} parent=1 // loop_pre_header
      _
    $region3: #{tpu_custom_call.1} parent=1 // loop_header
      %s29 = sphi 0, %s33
      %p30 = scmp.ge.s32.totalorder %s29, 4
      %s36 = sphi 0, %s48
      %s37 = sphi 0, %s44
      %s38 = sphi 0, %s36
      %s39 = sphi 0, %s37
      %s40 = sphi 0, %s38
      %s41 = sphi 0, %s39
      %s51 = sphi 0, %s53
      %s54 = sphi 0, %s51
      %s55 = sphi 0, %s54
      %s71 = sphi 0, %s55
      %s75 = sphi 0, %s75
      %s77 = sphi 0, %s75
      %s78 = sphi 0, %s77
      %s92 = sphi 0, %s78
      %s96 = sphi 0, %s96
      %s98 = sphi 0, %s96
      %s99 = sphi 0, %s98
      %s113 = sphi 0, %s99
      %s121 = sphi 0, %s123
      %s124 = sphi 0, %s121
      %s125 = sphi 0, %s124
      %s141 = sphi 0, %s125
    $region4: #{tpu_custom_call.1} parent=1 // loop_header_branch
      %32 = sbr.rel (%p30) target = $region8
    $region5: #{tpu_custom_call.1} parent=1 // loop_body
      %s34 = ssub.s32 %s29, 1
      %s35 = ssub.s32 %s29, 2
      %s42 = sadd.s32 1, %s37
      %p43 = scmp.ge.s32.totalorder %s42, 1
      %s44 = scalar_select %p43, 0, %s42
      %s45 = sadd.s32 1, %s36
      %s46 = scalar_select %p43, %s45, %s36
      %p47 = scmp.ge.s32.totalorder %s46, 2
      %s48 = scalar_select %p47, 0, %s46
      %s49 = ssub.s32 %s37, %s44
      %p50 = scmp.eq.s32.totalorder %s49, 0
      %s52 = sadd.s32 %s51, 1
      %s53 = scalar_select %p50, %s51, %s52
      %p56 = pneg %p50
      %p57 = scmp.eq.s32.totalorder %s29, 1
      %p58 = por %p56, %p57
      %p59 = scmp.ne.s32.totalorder %s51, %s54
      %p60 = scmp.eq.s32.totalorder %s29, 0
      %p61 = por %p59, %p60
      %p62 = scmp.ne.s32.totalorder %s51, %s54
      %p63 = scmp.eq.s32.totalorder %s34, 1
      %p64 = por %p62, %p63
      %p65 = scmp.ne.s32.totalorder %s54, %s55
      %p66 = scmp.eq.s32.totalorder %s34, 0
      %p67 = por %p65, %p66
      %p68 = scmp.ne.s32.totalorder %s54, %s55
      %p69 = scmp.eq.s32.totalorder %s35, 1
      %p70 = por %p68, %p69
      %p72 = scmp.ne.s32.totalorder %s55, %s71
      %p73 = scmp.eq.s32.totalorder %s35, 0
      %p74 = por %p72, %p73
      %s76 = sadd.s32 %s75, 1
      %p79 = scmp.eq.s32.totalorder %s29, 1
      %p80 = scmp.ne.s32.totalorder %s75, %s77
      %p81 = scmp.eq.s32.totalorder %s29, 0
      %p82 = por %p80, %p81
      %p83 = scmp.ne.s32.totalorder %s75, %s77
      %p84 = scmp.eq.s32.totalorder %s34, 1
      %p85 = por %p83, %p84
      %p86 = scmp.ne.s32.totalorder %s77, %s78
      %p87 = scmp.eq.s32.totalorder %s34, 0
      %p88 = por %p86, %p87
      %p89 = scmp.ne.s32.totalorder %s77, %s78
      %p90 = scmp.eq.s32.totalorder %s35, 1
      %p91 = por %p89, %p90
      %p93 = scmp.ne.s32.totalorder %s78, %s92
      %p94 = scmp.eq.s32.totalorder %s35, 0
      %p95 = por %p93, %p94
      %s97 = sadd.s32 %s96, 1
      %p100 = scmp.eq.s32.totalorder %s29, 1
      %p101 = scmp.ne.s32.totalorder %s96, %s98
      %p102 = scmp.eq.s32.totalorder %s29, 0
      %p103 = por %p101, %p102
      %p104 = scmp.ne.s32.totalorder %s96, %s98
      %p105 = scmp.eq.s32.totalorder %s34, 1
      %p106 = por %p104, %p105
      %p107 = scmp.ne.s32.totalorder %s98, %s99
      %p108 = scmp.eq.s32.totalorder %s34, 0
      %p109 = por %p107, %p108
      %p110 = scmp.ne.s32.totalorder %s98, %s99
      %p111 = scmp.eq.s32.totalorder %s35, 1
      %p112 = por %p110, %p111
      %p114 = scmp.ne.s32.totalorder %s99, %s113
      %p115 = scmp.eq.s32.totalorder %s35, 0
      %p116 = por %p114, %p115
      %s117 = ssub.s32 %s36, %s48
      %s118 = ssub.s32 %s37, %s44
      %s119 = sor.u32 %s117, %s118
      %p120 = scmp.eq.s32.totalorder %s119, 0
      %s122 = sadd.s32 %s121, 1
      %s123 = scalar_select %p120, %s121, %s122
      %p126 = pneg %p120
      %p127 = scmp.eq.s32.totalorder %s29, 1
      %p128 = por %p126, %p127
      %p129 = scmp.ne.s32.totalorder %s121, %s124
      %p130 = scmp.eq.s32.totalorder %s29, 0
      %p131 = por %p129, %p130
      %p132 = scmp.ne.s32.totalorder %s121, %s124
      %p133 = scmp.eq.s32.totalorder %s34, 1
      %p134 = por %p132, %p133
      %p135 = scmp.ne.s32.totalorder %s124, %s125
      %p136 = scmp.eq.s32.totalorder %s34, 0
      %p137 = por %p135, %p136
      %p138 = scmp.ne.s32.totalorder %s124, %s125
      %p139 = scmp.eq.s32.totalorder %s35, 1
      %p140 = por %p138, %p139
      %p142 = scmp.ne.s32.totalorder %s125, %s141
      %p143 = scmp.eq.s32.totalorder %s35, 0
      %p144 = por %p142, %p143
      %p145 = scmp.le.s32.totalorder 1, %s29
      %p146 = scmp.lt.s32.totalorder %s29, 3
      %p147 = pnand %p145, %p146
      %p148 = pneg %p147
      // Predicated region
      $region9: #{tpu_custom_call.1} parent=5 // pred_check
        _
      $region10: #{tpu_custom_call.1} parent=5 // pred_check_branch
        %150 = sbr.rel (%p147) target = $region12
      $region11: #{tpu_custom_call.1} parent=5 // pred_region
        %s151 = ssub.s32 %s29, 1
        // Predicated region
        $region13: #{tpu_custom_call.1} parent=11 // pred_check
          %p152 = pneg %p67
        $region14: #{tpu_custom_call.1} parent=11 // pred_check_branch
          %154 = sbr.rel (%p152) target = $region16
        $region15: #{tpu_custom_call.1} parent=11 // pred_region
          %p155 = scmp.lt.s32.totalorder %s39, 7
          %s156 = scalar_select %p155, %s39, 7
          %s157 = smul.addr %s156, 8
          %s158 = scalar_lea.vmem %s4, %s157
        $region16: #{tpu_custom_call.1} parent=11 // pred_fallthru
          _
        // Predicated region
        $region17: #{tpu_custom_call.1} parent=11 // pred_check
          %p159 = pneg %p88
        $region18: #{tpu_custom_call.1} parent=11 // pred_check_branch
          %161 = sbr.rel (%p159) target = $region20
        $region19: #{tpu_custom_call.1} parent=11 // pred_region
          _
        $region20: #{tpu_custom_call.1} parent=11 // pred_fallthru
          _
        // Predicated region
        $region21: #{tpu_custom_call.1} parent=11 // pred_check
          %p162 = pneg %p109
        $region22: #{tpu_custom_call.1} parent=11 // pred_check_branch
          %164 = sbr.rel (%p162) target = $region24
        $region23: #{tpu_custom_call.1} parent=11 // pred_region
          _
        $region24: #{tpu_custom_call.1} parent=11 // pred_fallthru
          _
      $region12: #{tpu_custom_call.1} parent=5 // pred_fallthru
        _
      %p165 = scmp.lt.s32.totalorder %s29, 2
      // Predicated region
      $region25: #{tpu_custom_call.1} parent=5 // pred_check
        %p166 = pneg %p165
      $region26: #{tpu_custom_call.1} parent=5 // pred_check_branch
        %168 = sbr.rel (%p166) target = $region28
      $region27: #{tpu_custom_call.1} parent=5 // pred_region
        _
      $region28: #{tpu_custom_call.1} parent=5 // pred_fallthru
        _
      %p169 = scmp.le.s32.totalorder 1, %s29
      %p170 = scmp.lt.s32.totalorder %s29, 3
      %p171 = pnand %p169, %p170
      %p172 = pneg %p171
      // Predicated region
      $region29: #{tpu_custom_call.1} parent=5 // pred_check
        _
      $region30: #{tpu_custom_call.1} parent=5 // pred_check_branch
        %174 = sbr.rel (%p171) target = $region32
      $region31: #{tpu_custom_call.1} parent=5 // pred_region
        %s175 = ssub.s32 %s29, 1
        %p176 = scmp.lt.s32.totalorder %s39, 7
        %s177 = scalar_select %p176, %s39, 7
        %s178 = smul.addr %s177, 8
        %s179 = scalar_lea.vmem %s4, %s178
        %p180 = pneg %p67
        %p181 = pneg %p64
        %p182 = pneg %p88
        %p183 = pneg %p85
        %p184 = pneg %p109
        %p185 = pneg %p106
        %p186 = pneg %p137
        %p187 = pneg %p134
        %s188 = sand.u32 %s124, 1
        %s189 = scalar_lea.sflag [#allocation9], %s188
        %s190 = sand.u32 %s124, 1
        %s191 = smul.addr %s190, 8
        %s192 = scalar_lea.vmem [#allocation8], %s191
        %p193 = scmp.lt.s32.totalorder %s39, 7
        %s194 = scalar_select %p193, %s39, 7
        %s195 = smul.addr %s194, 8
        %s196 = scalar_lea.vmem %s4, %s195
        %s197 = smul.u32 %s39, 8
        %s198 = sshra.s32 %s197, 7
        %s199 = sand.u32 %s197, 127
        %s200 = sadd.s32 %s198, %s38
        %s201 = smul.u32 %s200, 128
        %s202 = sshra.s32 %s197, 7
        %s203 = sand.u32 %s197, 127
        %s204 = sadd.s32 %s201, %s203
        %s205 = sld [smem:[#allocation6 + %s204]]
        %s206 = sld [smem:[#allocation7 + %s204]]
        %s207 = scalar_lea.vmem %s2, %s205
        // Predicated region
        $region33: #{tpu_custom_call.1} parent=31 // pred_check
          _
        $region34: #{tpu_custom_call.1} parent=31 // pred_check_branch
          %209 = sbr.rel target = $region36
        $region35: #{tpu_custom_call.1} parent=31 // pred_region
          // Predicated region
          $region48: #{tpu_custom_call.1} parent=35 // pred_check
            _
          $region49: #{tpu_custom_call.1} parent=35 // pred_check_branch
            %225 = sbr.rel (0) target = $region51
          $region50: #{tpu_custom_call.1} parent=35 // pred_region
            %s227 = ssub.s32 2, 1
            loop: start=0, step=1, limit=1
            $region52: #{tpu_custom_call.1} parent=50 // loop_pre_header
              _
            $region53: #{tpu_custom_call.1} parent=50 // loop_header
              %s229 = sphi 0, %s233
              %p230 = scmp.ge.s32.totalorder %s229, 1
              %s234 = sphi %s207, %s207
              %s235 = sphi [#allocation2], [#allocation2]
            $region54: #{tpu_custom_call.1} parent=50 // loop_header_branch
              %232 = sbr.rel (%p230) target = $region58
            $region55: #{tpu_custom_call.1} parent=50 // loop_body
              %v236 = vld [vmem:[%s234] sm:%s227]
              %237 = vst [vmem:[%s235] sm:%s227] %v236
            $region56: #{tpu_custom_call.1} parent=50 // loop_footer
              %s233 = sadd.s32 1, %s229
            $region57: #{tpu_custom_call.1} parent=50 // loop_footer_branch
              %228 = sbr.rel target = $region53
            $region58: #{tpu_custom_call.1} parent=50 // loop_exit
              _
          $region51: #{tpu_custom_call.1} parent=35 // pred_fallthru
            _
        $region36: #{tpu_custom_call.1} parent=31 // pred_fallthru
          _
        // Predicated region
        $region37: #{tpu_custom_call.1} parent=31 // pred_check
          _
        $region38: #{tpu_custom_call.1} parent=31 // pred_check_branch
          %211 = sbr.rel (0) target = $region40
        $region39: #{tpu_custom_call.1} parent=31 // pred_region
          %s213 = ssub.s32 2, 1
          loop: start=0, step=1, limit=1
          $region41: #{tpu_custom_call.1} parent=39 // loop_pre_header
            _
          $region42: #{tpu_custom_call.1} parent=39 // loop_header
            %s215 = sphi 0, %s219
            %p216 = scmp.ge.s32.totalorder %s215, 1
            %s220 = sphi %s207, %s207
            %s221 = sphi [#allocation2], [#allocation2]
          $region43: #{tpu_custom_call.1} parent=39 // loop_header_branch
            %218 = sbr.rel (%p216) target = $region47
          $region44: #{tpu_custom_call.1} parent=39 // loop_body
            %v222 = vld [vmem:[%s220] sm:%s213]
            %223 = vst [vmem:[%s221] sm:%s213] %v222
          $region45: #{tpu_custom_call.1} parent=39 // loop_footer
            %s219 = sadd.s32 1, %s215
          $region46: #{tpu_custom_call.1} parent=39 // loop_footer_branch
            %214 = sbr.rel target = $region42
          $region47: #{tpu_custom_call.1} parent=39 // loop_exit
            _
        $region40: #{tpu_custom_call.1} parent=31 // pred_fallthru
          _
        // Predicated region
        $region59: #{tpu_custom_call.1} parent=31 // pred_check
          _
        $region60: #{tpu_custom_call.1} parent=31 // pred_check_branch
          %240 = sbr.rel (0) target = $region62
        $region61: #{tpu_custom_call.1} parent=31 // pred_region
          %241 = vsyncadd [#allocation4], 16
        $region62: #{tpu_custom_call.1} parent=31 // pred_fallthru
          _
        %s242 = scalar_lea.vmem %s3, %s206
        %s243 = scalar_lea.sflag [#allocation4], 8
        // Predicated region
        $region63: #{tpu_custom_call.1} parent=31 // pred_check
          _
        $region64: #{tpu_custom_call.1} parent=31 // pred_check_branch
          %245 = sbr.rel target = $region66
        $region65: #{tpu_custom_call.1} parent=31 // pred_region
          // Predicated region
          $region78: #{tpu_custom_call.1} parent=65 // pred_check
            _
          $region79: #{tpu_custom_call.1} parent=65 // pred_check_branch
            %261 = sbr.rel (0) target = $region81
          $region80: #{tpu_custom_call.1} parent=65 // pred_region
            %s263 = ssub.s32 2, 1
            loop: start=0, step=1, limit=1
            $region82: #{tpu_custom_call.1} parent=80 // loop_pre_header
              _
            $region83: #{tpu_custom_call.1} parent=80 // loop_header
              %s265 = sphi 0, %s269
              %p266 = scmp.ge.s32.totalorder %s265, 1
              %s270 = sphi %s242, %s242
              %s271 = sphi [#allocation3], [#allocation3]
            $region84: #{tpu_custom_call.1} parent=80 // loop_header_branch
              %268 = sbr.rel (%p266) target = $region88
            $region85: #{tpu_custom_call.1} parent=80 // loop_body
              %v272 = vld [vmem:[%s270] sm:%s263]
              %273 = vst [vmem:[%s271] sm:%s263] %v272
            $region86: #{tpu_custom_call.1} parent=80 // loop_footer
              %s269 = sadd.s32 1, %s265
            $region87: #{tpu_custom_call.1} parent=80 // loop_footer_branch
              %264 = sbr.rel target = $region83
            $region88: #{tpu_custom_call.1} parent=80 // loop_exit
              _
          $region81: #{tpu_custom_call.1} parent=65 // pred_fallthru
            _
        $region66: #{tpu_custom_call.1} parent=31 // pred_fallthru
          _
        // Predicated region
        $region67: #{tpu_custom_call.1} parent=31 // pred_check
          _
        $region68: #{tpu_custom_call.1} parent=31 // pred_check_branch
          %247 = sbr.rel (0) target = $region70
        $region69: #{tpu_custom_call.1} parent=31 // pred_region
          %s249 = ssub.s32 2, 1
          loop: start=0, step=1, limit=1
          $region71: #{tpu_custom_call.1} parent=69 // loop_pre_header
            _
          $region72: #{tpu_custom_call.1} parent=69 // loop_header
            %s251 = sphi 0, %s255
            %p252 = scmp.ge.s32.totalorder %s251, 1
            %s256 = sphi %s242, %s242
            %s257 = sphi [#allocation3], [#allocation3]
          $region73: #{tpu_custom_call.1} parent=69 // loop_header_branch
            %254 = sbr.rel (%p252) target = $region77
          $region74: #{tpu_custom_call.1} parent=69 // loop_body
            %v258 = vld [vmem:[%s256] sm:%s249]
            %259 = vst [vmem:[%s257] sm:%s249] %v258
          $region75: #{tpu_custom_call.1} parent=69 // loop_footer
            %s255 = sadd.s32 1, %s251
          $region76: #{tpu_custom_call.1} parent=69 // loop_footer_branch
            %250 = sbr.rel target = $region72
          $region77: #{tpu_custom_call.1} parent=69 // loop_exit
            _
        $region70: #{tpu_custom_call.1} parent=31 // pred_fallthru
          _
        // Predicated region
        $region89: #{tpu_custom_call.1} parent=31 // pred_check
          _
        $region90: #{tpu_custom_call.1} parent=31 // pred_check_branch
          %276 = sbr.rel (0) target = $region92
        $region91: #{tpu_custom_call.1} parent=31 // pred_region
          %277 = vsyncadd %s243, 16
        $region92: #{tpu_custom_call.1} parent=31 // pred_fallthru
          _
        %s278 = sadd.s32 %s197, 1
        %s279 = sshra.s32 %s278, 7
        %s280 = sand.u32 %s278, 127
        %s281 = sadd.s32 %s279, %s38
        %s282 = smul.u32 %s281, 128
        %s283 = sshra.s32 %s278, 7
        %s284 = sand.u32 %s278, 127
        %s285 = sadd.s32 %s282, %s284
        %s286 = sld [smem:[#allocation6 + %s285]]
        %s287 = sld [smem:[#allocation7 + %s285]]
        %s288 = scalar_lea.vmem %s2, %s286
        %s289 = scalar_lea.vmem [#allocation2], 1
        %s290 = scalar_lea.sflag [#allocation4], 1
        // Predicated region
        $region93: #{tpu_custom_call.1} parent=31 // pred_check
          _
        $region94: #{tpu_custom_call.1} parent=31 // pred_check_branch
          %292 = sbr.rel target = $region96
        $region95: #{tpu_custom_call.1} parent=31 // pred_region
          // Predicated region
          $region108: #{tpu_custom_call.1} parent=95 // pred_check
            _
          $region109: #{tpu_custom_call.1} parent=95 // pred_check_branch
            %308 = sbr.rel (0) target = $region111
          $region110: #{tpu_custom_call.1} parent=95 // pred_region
            %s310 = ssub.s32 2, 1
            loop: start=0, step=1, limit=1
            $region112: #{tpu_custom_call.1} parent=110 // loop_pre_header
              _
            $region113: #{tpu_custom_call.1} parent=110 // loop_header
              %s312 = sphi 0, %s316
              %p313 = scmp.ge.s32.totalorder %s312, 1
              %s317 = sphi %s288, %s288
              %s318 = sphi %s289, %s289
            $region114: #{tpu_custom_call.1} parent=110 // loop_header_branch
              %315 = sbr.rel (%p313) target = $region118
            $region115: #{tpu_custom_call.1} parent=110 // loop_body
              %v319 = vld [vmem:[%s317] sm:%s310]
              %320 = vst [vmem:[%s318] sm:%s310] %v319
            $region116: #{tpu_custom_call.1} parent=110 // loop_footer
              %s316 = sadd.s32 1, %s312
            $region117: #{tpu_custom_call.1} parent=110 // loop_footer_branch
              %311 = sbr.rel target = $region113
            $region118: #{tpu_custom_call.1} parent=110 // loop_exit
              _
          $region111: #{tpu_custom_call.1} parent=95 // pred_fallthru
            _
        $region96: #{tpu_custom_call.1} parent=31 // pred_fallthru
          _
        // Predicated region
        $region97: #{tpu_custom_call.1} parent=31 // pred_check
          _
        $region98: #{tpu_custom_call.1} parent=31 // pred_check_branch
          %294 = sbr.rel (0) target = $region100
        $region99: #{tpu_custom_call.1} parent=31 // pred_region
          %s296 = ssub.s32 2, 1
          loop: start=0, step=1, limit=1
          $region101: #{tpu_custom_call.1} parent=99 // loop_pre_header
            _
          $region102: #{tpu_custom_call.1} parent=99 // loop_header
            %s298 = sphi 0, %s302
            %p299 = scmp.ge.s32.totalorder %s298, 1
            %s303 = sphi %s288, %s288
            %s304 = sphi %s289, %s289
          $region103: #{tpu_custom_call.1} parent=99 // loop_header_branch
            %301 = sbr.rel (%p299) target = $region107
          $region104: #{tpu_custom_call.1} parent=99 // loop_body
            %v305 = vld [vmem:[%s303] sm:%s296]
            %306 = vst [vmem:[%s304] sm:%s296] %v305
          $region105: #{tpu_custom_call.1} parent=99 // loop_footer
            %s302 = sadd.s32 1, %s298
          $region106: #{tpu_custom_call.1} parent=99 // loop_footer_branch
            %297 = sbr.rel target = $region102
          $region107: #{tpu_custom_call.1} parent=99 // loop_exit
            _
        $region100: #{tpu_custom_call.1} parent=31 // pred_fallthru
          _
        // Predicated region
        $region119: #{tpu_custom_call.1} parent=31 // pred_check
          _
        $region120: #{tpu_custom_call.1} parent=31 // pred_check_branch
          %323 = sbr.rel (0) target = $region122
        $region121: #{tpu_custom_call.1} parent=31 // pred_region
          %324 = vsyncadd %s290, 16
        $region122: #{tpu_custom_call.1} parent=31 // pred_fallthru
          _
        %s325 = scalar_lea.vmem %s3, %s287
        %s326 = scalar_lea.vmem [#allocation3], 1
        %s327 = scalar_lea.sflag [#allocation4], 9
        // Predicated region
        $region123: #{tpu_custom_call.1} parent=31 // pred_check
          _
        $region124: #{tpu_custom_call.1} parent=31 // pred_check_branch
          %329 = sbr.rel target = $region126
        $region125: #{tpu_custom_call.1} parent=31 // pred_region
          // Predicated region
          $region138: #{tpu_custom_call.1} parent=125 // pred_check
            _
          $region139: #{tpu_custom_call.1} parent=125 // pred_check_branch
            %345 = sbr.rel (0) target = $region141
          $region140: #{tpu_custom_call.1} parent=125 // pred_region
            %s347 = ssub.s32 2, 1
            loop: start=0, step=1, limit=1
            $region142: #{tpu_custom_call.1} parent=140 // loop_pre_header
              _
            $region143: #{tpu_custom_call.1} parent=140 // loop_header
              %s349 = sphi 0, %s353
              %p350 = scmp.ge.s32.totalorder %s349, 1
              %s354 = sphi %s325, %s325
              %s355 = sphi %s326, %s326
            $region144: #{tpu_custom_call.1} parent=140 // loop_header_branch
              %352 = sbr.rel (%p350) target = $region148
            $region145: #{tpu_custom_call.1} parent=140 // loop_body
              %v356 = vld [vmem:[%s354] sm:%s347]
              %357 = vst [vmem:[%s355] sm:%s347] %v356
            $region146: #{tpu_custom_call.1} parent=140 // loop_footer
              %s353 = sadd.s32 1, %s349
            $region147: #{tpu_custom_call.1} parent=140 // loop_footer_branch
              %348 = sbr.rel target = $region143
            $region148: #{tpu_custom_call.1} parent=140 // loop_exit
              _
          $region141: #{tpu_custom_call.1} parent=125 // pred_fallthru
            _
        $region126: #{tpu_custom_call.1} parent=31 // pred_fallthru
          _
        // Predicated region
        $region127: #{tpu_custom_call.1} parent=31 // pred_check
          _
        $region128: #{tpu_custom_call.1} parent=31 // pred_check_branch
          %331 = sbr.rel (0) target = $region130
        $region129: #{tpu_custom_call.1} parent=31 // pred_region
          %s333 = ssub.s32 2, 1
          loop: start=0, step=1, limit=1
          $region131: #{tpu_custom_call.1} parent=129 // loop_pre_header
            _
          $region132: #{tpu_custom_call.1} parent=129 // loop_header
            %s335 = sphi 0, %s339
            %p336 = scmp.ge.s32.totalorder %s335, 1
            %s340 = sphi %s325, %s325
            %s341 = sphi %s326, %s326
          $region133: #{tpu_custom_call.1} parent=129 // loop_header_branch
            %338 = sbr.rel (%p336) target = $region137
          $region134: #{tpu_custom_call.1} parent=129 // loop_body
            %v342 = vld [vmem:[%s340] sm:%s333]
            %343 = vst [vmem:[%s341] sm:%s333] %v342
          $region135: #{tpu_custom_call.1} parent=129 // loop_footer
            %s339 = sadd.s32 1, %s335
          $region136: #{tpu_custom_call.1} parent=129 // loop_footer_branch
            %334 = sbr.rel target = $region132
          $region137: #{tpu_custom_call.1} parent=129 // loop_exit
            _
        $region130: #{tpu_custom_call.1} parent=31 // pred_fallthru
          _
        // Predicated region
        $region149: #{tpu_custom_call.1} parent=31 // pred_check
          _
        $region150: #{tpu_custom_call.1} parent=31 // pred_check_branch
          %360 = sbr.rel (0) target = $region152
        $region151: #{tpu_custom_call.1} parent=31 // pred_region
          %361 = vsyncadd %s327, 16
        $region152: #{tpu_custom_call.1} parent=31 // pred_fallthru
          _
        %s362 = sadd.s32 %s197, 2
        %s363 = sshra.s32 %s362, 7
        %s364 = sand.u32 %s362, 127
        %s365 = sadd.s32 %s363, %s38
        %s366 = smul.u32 %s365, 128
        %s367 = sshra.s32 %s362, 7
        %s368 = sand.u32 %s362, 127
        %s369 = sadd.s32 %s366, %s368
        %s370 = sld [smem:[#allocation6 + %s369]]
        %s371 = sld [smem:[#allocation7 + %s369]]
        %s372 = scalar_lea.vmem %s2, %s370
        %s373 = scalar_lea.vmem [#allocation2], 2
        %s374 = scalar_lea.sflag [#allocation4], 2
        // Predicated region
        $region153: #{tpu_custom_call.1} parent=31 // pred_check
          _
        $region154: #{tpu_custom_call.1} parent=31 // pred_check_branch
          %376 = sbr.rel target = $region156
        $region155: #{tpu_custom_call.1} parent=31 // pred_region
          // Predicated region
          $region168: #{tpu_custom_call.1} parent=155 // pred_check
            _
          $region169: #{tpu_custom_call.1} parent=155 // pred_check_branch
            %392 = sbr.rel (0) target = $region171
          $region170: #{tpu_custom_call.1} parent=155 // pred_region
            %s394 = ssub.s32 2, 1
            loop: start=0, step=1, limit=1
            $region172: #{tpu_custom_call.1} parent=170 // loop_pre_header
              _
            $region173: #{tpu_custom_call.1} parent=170 // loop_header
              %s396 = sphi 0, %s400
              %p397 = scmp.ge.s32.totalorder %s396, 1
              %s401 = sphi %s372, %s372
              %s402 = sphi %s373, %s373
            $region174: #{tpu_custom_call.1} parent=170 // loop_header_branch
              %399 = sbr.rel (%p397) target = $region178
            $region175: #{tpu_custom_call.1} parent=170 // loop_body
              %v403 = vld [vmem:[%s401] sm:%s394]
              %404 = vst [vmem:[%s402] sm:%s394] %v403
            $region176: #{tpu_custom_call.1} parent=170 // loop_footer
              %s400 = sadd.s32 1, %s396
            $region177: #{tpu_custom_call.1} parent=170 // loop_footer_branch
              %395 = sbr.rel target = $region173
            $region178: #{tpu_custom_call.1} parent=170 // loop_exit
              _
          $region171: #{tpu_custom_call.1} parent=155 // pred_fallthru
            _
        $region156: #{tpu_custom_call.1} parent=31 // pred_fallthru
          _
        // Predicated region
        $region157: #{tpu_custom_call.1} parent=31 // pred_check
          _
        $region158: #{tpu_custom_call.1} parent=31 // pred_check_branch
          %378 = sbr.rel (0) target = $region160
        $region159: #{tpu_custom_call.1} parent=31 // pred_region
          %s380 = ssub.s32 2, 1
          loop: start=0, step=1, limit=1
          $region161: #{tpu_custom_call.1} parent=159 // loop_pre_header
            _
          $region162: #{tpu_custom_call.1} parent=159 // loop_header
            %s382 = sphi 0, %s386
            %p383 = scmp.ge.s32.totalorder %s382, 1
            %s387 = sphi %s372, %s372
            %s388 = sphi %s373, %s373
          $region163: #{tpu_custom_call.1} parent=159 // loop_header_branch
            %385 = sbr.rel (%p383) target = $region167
          $region164: #{tpu_custom_call.1} parent=159 // loop_body
            %v389 = vld [vmem:[%s387] sm:%s380]
            %390 = vst [vmem:[%s388] sm:%s380] %v389
          $region165: #{tpu_custom_call.1} parent=159 // loop_footer
            %s386 = sadd.s32 1, %s382
          $region166: #{tpu_custom_call.1} parent=159 // loop_footer_branch
            %381 = sbr.rel target = $region162
          $region167: #{tpu_custom_call.1} parent=159 // loop_exit
            _
        $region160: #{tpu_custom_call.1} parent=31 // pred_fallthru
          _
        // Predicated region
        $region179: #{tpu_custom_call.1} parent=31 // pred_check
          _
        $region180: #{tpu_custom_call.1} parent=31 // pred_check_branch
          %407 = sbr.rel (0) target = $region182
        $region181: #{tpu_custom_call.1} parent=31 // pred_region
          %408 = vsyncadd %s374, 16
        $region182: #{tpu_custom_call.1} parent=31 // pred_fallthru
          _
        %s409 = scalar_lea.vmem %s3, %s371
        %s410 = scalar_lea.vmem [#allocation3], 2
        %s411 = scalar_lea.sflag [#allocation4], 10
        // Predicated region
        $region183: #{tpu_custom_call.1} parent=31 // pred_check
          _
        $region184: #{tpu_custom_call.1} parent=31 // pred_check_branch
          %413 = sbr.rel target = $region186
        $region185: #{tpu_custom_call.1} parent=31 // pred_region
          // Predicated region
          $region198: #{tpu_custom_call.1} parent=185 // pred_check
            _
          $region199: #{tpu_custom_call.1} parent=185 // pred_check_branch
            %429 = sbr.rel (0) target = $region201
          $region200: #{tpu_custom_call.1} parent=185 // pred_region
            %s431 = ssub.s32 2, 1
            loop: start=0, step=1, limit=1
            $region202: #{tpu_custom_call.1} parent=200 // loop_pre_header
              _
            $region203: #{tpu_custom_call.1} parent=200 // loop_header
              %s433 = sphi 0, %s437
              %p434 = scmp.ge.s32.totalorder %s433, 1
              %s438 = sphi %s409, %s409
              %s439 = sphi %s410, %s410
            $region204: #{tpu_custom_call.1} parent=200 // loop_header_branch
              %436 = sbr.rel (%p434) target = $region208
            $region205: #{tpu_custom_call.1} parent=200 // loop_body
              %v440 = vld [vmem:[%s438] sm:%s431]
              %441 = vst [vmem:[%s439] sm:%s431] %v440
            $region206: #{tpu_custom_call.1} parent=200 // loop_footer
              %s437 = sadd.s32 1, %s433
            $region207: #{tpu_custom_call.1} parent=200 // loop_footer_branch
              %432 = sbr.rel target = $region203
            $region208: #{tpu_custom_call.1} parent=200 // loop_exit
              _
          $region201: #{tpu_custom_call.1} parent=185 // pred_fallthru
            _
        $region186: #{tpu_custom_call.1} parent=31 // pred_fallthru
          _
        // Predicated region
        $region187: #{tpu_custom_call.1} parent=31 // pred_check
          _
        $region188: #{tpu_custom_call.1} parent=31 // pred_check_branch
          %415 = sbr.rel (0) target = $region190
        $region189: #{tpu_custom_call.1} parent=31 // pred_region
          %s417 = ssub.s32 2, 1
          loop: start=0, step=1, limit=1
          $region191: #{tpu_custom_call.1} parent=189 // loop_pre_header
            _
          $region192: #{tpu_custom_call.1} parent=189 // loop_header
            %s419 = sphi 0, %s423
            %p420 = scmp.ge.s32.totalorder %s419, 1
            %s424 = sphi %s409, %s409
            %s425 = sphi %s410, %s410
          $region193: #{tpu_custom_call.1} parent=189 // loop_header_branch
            %422 = sbr.rel (%p420) target = $region197
          $region194: #{tpu_custom_call.1} parent=189 // loop_body
            %v426 = vld [vmem:[%s424] sm:%s417]
            %427 = vst [vmem:[%s425] sm:%s417] %v426
          $region195: #{tpu_custom_call.1} parent=189 // loop_footer
            %s423 = sadd.s32 1, %s419
          $region196: #{tpu_custom_call.1} parent=189 // loop_footer_branch
            %418 = sbr.rel target = $region192
          $region197: #{tpu_custom_call.1} parent=189 // loop_exit
            _
        $region190: #{tpu_custom_call.1} parent=31 // pred_fallthru
          _
        // Predicated region
        $region209: #{tpu_custom_call.1} parent=31 // pred_check
          _
        $region210: #{tpu_custom_call.1} parent=31 // pred_check_branch
          %444 = sbr.rel (0) target = $region212
        $region211: #{tpu_custom_call.1} parent=31 // pred_region
          %445 = vsyncadd %s411, 16
        $region212: #{tpu_custom_call.1} parent=31 // pred_fallthru
          _
        %s446 = sadd.s32 %s197, 3
        %s447 = sshra.s32 %s446, 7
        %s448 = sand.u32 %s446, 127
        %s449 = sadd.s32 %s447, %s38
        %s450 = smul.u32 %s449, 128
        %s451 = sshra.s32 %s446, 7
        %s452 = sand.u32 %s446, 127
        %s453 = sadd.s32 %s450, %s452
        %s454 = sld [smem:[#allocation6 + %s453]]
        %s455 = sld [smem:[#allocation7 + %s453]]
        %s456 = scalar_lea.vmem %s2, %s454
        %s457 = scalar_lea.vmem [#allocation2], 3
        %s458 = scalar_lea.sflag [#allocation4], 3
        // Predicated region
        $region213: #{tpu_custom_call.1} parent=31 // pred_check
          _
        $region214: #{tpu_custom_call.1} parent=31 // pred_check_branch
          %460 = sbr.rel target = $region216
        $region215: #{tpu_custom_call.1} parent=31 // pred_region
          // Predicated region
          $region228: #{tpu_custom_call.1} parent=215 // pred_check
            _
          $region229: #{tpu_custom_call.1} parent=215 // pred_check_branch
            %476 = sbr.rel (0) target = $region231
          $region230: #{tpu_custom_call.1} parent=215 // pred_region
            %s478 = ssub.s32 2, 1
            loop: start=0, step=1, limit=1
            $region232: #{tpu_custom_call.1} parent=230 // loop_pre_header
              _
            $region233: #{tpu_custom_call.1} parent=230 // loop_header
              %s480 = sphi 0, %s484
              %p481 = scmp.ge.s32.totalorder %s480, 1
              %s485 = sphi %s456, %s456
              %s486 = sphi %s457, %s457
            $region234: #{tpu_custom_call.1} parent=230 // loop_header_branch
              %483 = sbr.rel (%p481) target = $region238
            $region235: #{tpu_custom_call.1} parent=230 // loop_body
              %v487 = vld [vmem:[%s485] sm:%s478]
              %488 = vst [vmem:[%s486] sm:%s478] %v487
            $region236: #{tpu_custom_call.1} parent=230 // loop_footer
              %s484 = sadd.s32 1, %s480
            $region237: #{tpu_custom_call.1} parent=230 // loop_footer_branch
              %479 = sbr.rel target = $region233
            $region238: #{tpu_custom_call.1} parent=230 // loop_exit
              _
          $region231: #{tpu_custom_call.1} parent=215 // pred_fallthru
            _
        $region216: #{tpu_custom_call.1} parent=31 // pred_fallthru
          _
        // Predicated region
        $region217: #{tpu_custom_call.1} parent=31 // pred_check
          _
        $region218: #{tpu_custom_call.1} parent=31 // pred_check_branch
          %462 = sbr.rel (0) target = $region220
        $region219: #{tpu_custom_call.1} parent=31 // pred_region
          %s464 = ssub.s32 2, 1
          loop: start=0, step=1, limit=1
          $region221: #{tpu_custom_call.1} parent=219 // loop_pre_header
            _
          $region222: #{tpu_custom_call.1} parent=219 // loop_header
            %s466 = sphi 0, %s470
            %p467 = scmp.ge.s32.totalorder %s466, 1
            %s471 = sphi %s456, %s456
            %s472 = sphi %s457, %s457
          $region223: #{tpu_custom_call.1} parent=219 // loop_header_branch
            %469 = sbr.rel (%p467) target = $region227
          $region224: #{tpu_custom_call.1} parent=219 // loop_body
            %v473 = vld [vmem:[%s471] sm:%s464]
            %474 = vst [vmem:[%s472] sm:%s464] %v473
          $region225: #{tpu_custom_call.1} parent=219 // loop_footer
            %s470 = sadd.s32 1, %s466
          $region226: #{tpu_custom_call.1} parent=219 // loop_footer_branch
            %465 = sbr.rel target = $region222
          $region227: #{tpu_custom_call.1} parent=219 // loop_exit
            _
        $region220: #{tpu_custom_call.1} parent=31 // pred_fallthru
          _
        // Predicated region
        $region239: #{tpu_custom_call.1} parent=31 // pred_check
          _
        $region240: #{tpu_custom_call.1} parent=31 // pred_check_branch
          %491 = sbr.rel (0) target = $region242
        $region241: #{tpu_custom_call.1} parent=31 // pred_region
          %492 = vsyncadd %s458, 16
        $region242: #{tpu_custom_call.1} parent=31 // pred_fallthru
          _
        %s493 = scalar_lea.vmem %s3, %s455
        %s494 = scalar_lea.vmem [#allocation3], 3
        %s495 = scalar_lea.sflag [#allocation4], 11
        // Predicated region
        $region243: #{tpu_custom_call.1} parent=31 // pred_check
          _
        $region244: #{tpu_custom_call.1} parent=31 // pred_check_branch
          %497 = sbr.rel target = $region246
        $region245: #{tpu_custom_call.1} parent=31 // pred_region
          // Predicated region
          $region258: #{tpu_custom_call.1} parent=245 // pred_check
            _
          $region259: #{tpu_custom_call.1} parent=245 // pred_check_branch
            %513 = sbr.rel (0) target = $region261
          $region260: #{tpu_custom_call.1} parent=245 // pred_region
            %s515 = ssub.s32 2, 1
            loop: start=0, step=1, limit=1
            $region262: #{tpu_custom_call.1} parent=260 // loop_pre_header
              _
            $region263: #{tpu_custom_call.1} parent=260 // loop_header
              %s517 = sphi 0, %s521
              %p518 = scmp.ge.s32.totalorder %s517, 1
              %s522 = sphi %s493, %s493
              %s523 = sphi %s494, %s494
            $region264: #{tpu_custom_call.1} parent=260 // loop_header_branch
              %520 = sbr.rel (%p518) target = $region268
            $region265: #{tpu_custom_call.1} parent=260 // loop_body
              %v524 = vld [vmem:[%s522] sm:%s515]
              %525 = vst [vmem:[%s523] sm:%s515] %v524
            $region266: #{tpu_custom_call.1} parent=260 // loop_footer
              %s521 = sadd.s32 1, %s517
            $region267: #{tpu_custom_call.1} parent=260 // loop_footer_branch
              %516 = sbr.rel target = $region263
            $region268: #{tpu_custom_call.1} parent=260 // loop_exit
              _
          $region261: #{tpu_custom_call.1} parent=245 // pred_fallthru
            _
        $region246: #{tpu_custom_call.1} parent=31 // pred_fallthru
          _
        // Predicated region
        $region247: #{tpu_custom_call.1} parent=31 // pred_check
          _
        $region248: #{tpu_custom_call.1} parent=31 // pred_check_branch
          %499 = sbr.rel (0) target = $region250
        $region249: #{tpu_custom_call.1} parent=31 // pred_region
          %s501 = ssub.s32 2, 1
          loop: start=0, step=1, limit=1
          $region251: #{tpu_custom_call.1} parent=249 // loop_pre_header
            _
          $region252: #{tpu_custom_call.1} parent=249 // loop_header
            %s503 = sphi 0, %s507
            %p504 = scmp.ge.s32.totalorder %s503, 1
            %s508 = sphi %s493, %s493
            %s509 = sphi %s494, %s494
          $region253: #{tpu_custom_call.1} parent=249 // loop_header_branch
            %506 = sbr.rel (%p504) target = $region257
          $region254: #{tpu_custom_call.1} parent=249 // loop_body
            %v510 = vld [vmem:[%s508] sm:%s501]
            %511 = vst [vmem:[%s509] sm:%s501] %v510
          $region255: #{tpu_custom_call.1} parent=249 // loop_footer
            %s507 = sadd.s32 1, %s503
          $region256: #{tpu_custom_call.1} parent=249 // loop_footer_branch
            %502 = sbr.rel target = $region252
          $region257: #{tpu_custom_call.1} parent=249 // loop_exit
            _
        $region250: #{tpu_custom_call.1} parent=31 // pred_fallthru
          _
        // Predicated region
        $region269: #{tpu_custom_call.1} parent=31 // pred_check
          _
        $region270: #{tpu_custom_call.1} parent=31 // pred_check_branch
          %528 = sbr.rel (0) target = $region272
        $region271: #{tpu_custom_call.1} parent=31 // pred_region
          %529 = vsyncadd %s495, 16
        $region272: #{tpu_custom_call.1} parent=31 // pred_fallthru
          _
        %s530 = sadd.s32 %s197, 4
        %s531 = sshra.s32 %s530, 7
        %s532 = sand.u32 %s530, 127
        %s533 = sadd.s32 %s531, %s38
        %s534 = smul.u32 %s533, 128
        %s535 = sshra.s32 %s530, 7
        %s536 = sand.u32 %s530, 127
        %s537 = sadd.s32 %s534, %s536
        %s538 = sld [smem:[#allocation6 + %s537]]
        %s539 = sld [smem:[#allocation7 + %s537]]
        %s540 = scalar_lea.vmem %s2, %s538
        %s541 = scalar_lea.vmem [#allocation2], 4
        %s542 = scalar_lea.sflag [#allocation4], 4
        // Predicated region
        $region273: #{tpu_custom_call.1} parent=31 // pred_check
          _
        $region274: #{tpu_custom_call.1} parent=31 // pred_check_branch
          %544 = sbr.rel target = $region276
        $region275: #{tpu_custom_call.1} parent=31 // pred_region
          // Predicated region
          $region288: #{tpu_custom_call.1} parent=275 // pred_check
            _
          $region289: #{tpu_custom_call.1} parent=275 // pred_check_branch
            %560 = sbr.rel (0) target = $region291
          $region290: #{tpu_custom_call.1} parent=275 // pred_region
            %s562 = ssub.s32 2, 1
            loop: start=0, step=1, limit=1
            $region292: #{tpu_custom_call.1} parent=290 // loop_pre_header
              _
            $region293: #{tpu_custom_call.1} parent=290 // loop_header
              %s564 = sphi 0, %s568
              %p565 = scmp.ge.s32.totalorder %s564, 1
              %s569 = sphi %s540, %s540
              %s570 = sphi %s541, %s541
            $region294: #{tpu_custom_call.1} parent=290 // loop_header_branch
              %567 = sbr.rel (%p565) target = $region298
            $region295: #{tpu_custom_call.1} parent=290 // loop_body
              %v571 = vld [vmem:[%s569] sm:%s562]
              %572 = vst [vmem:[%s570] sm:%s562] %v571
            $region296: #{tpu_custom_call.1} parent=290 // loop_footer
              %s568 = sadd.s32 1, %s564
            $region297: #{tpu_custom_call.1} parent=290 // loop_footer_branch
              %563 = sbr.rel target = $region293
            $region298: #{tpu_custom_call.1} parent=290 // loop_exit
              _
          $region291: #{tpu_custom_call.1} parent=275 // pred_fallthru
            _
        $region276: #{tpu_custom_call.1} parent=31 // pred_fallthru
          _
        // Predicated region
        $region277: #{tpu_custom_call.1} parent=31 // pred_check
          _
        $region278: #{tpu_custom_call.1} parent=31 // pred_check_branch
          %546 = sbr.rel (0) target = $region280
        $region279: #{tpu_custom_call.1} parent=31 // pred_region
          %s548 = ssub.s32 2, 1
          loop: start=0, step=1, limit=1
          $region281: #{tpu_custom_call.1} parent=279 // loop_pre_header
            _
          $region282: #{tpu_custom_call.1} parent=279 // loop_header
            %s550 = sphi 0, %s554
            %p551 = scmp.ge.s32.totalorder %s550, 1
            %s555 = sphi %s540, %s540
            %s556 = sphi %s541, %s541
          $region283: #{tpu_custom_call.1} parent=279 // loop_header_branch
            %553 = sbr.rel (%p551) target = $region287
          $region284: #{tpu_custom_call.1} parent=279 // loop_body
            %v557 = vld [vmem:[%s555] sm:%s548]
            %558 = vst [vmem:[%s556] sm:%s548] %v557
          $region285: #{tpu_custom_call.1} parent=279 // loop_footer
            %s554 = sadd.s32 1, %s550
          $region286: #{tpu_custom_call.1} parent=279 // loop_footer_branch
            %549 = sbr.rel target = $region282
          $region287: #{tpu_custom_call.1} parent=279 // loop_exit
            _
        $region280: #{tpu_custom_call.1} parent=31 // pred_fallthru
          _
        // Predicated region
        $region299: #{tpu_custom_call.1} parent=31 // pred_check
          _
        $region300: #{tpu_custom_call.1} parent=31 // pred_check_branch
          %575 = sbr.rel (0) target = $region302
        $region301: #{tpu_custom_call.1} parent=31 // pred_region
          %576 = vsyncadd %s542, 16
        $region302: #{tpu_custom_call.1} parent=31 // pred_fallthru
          _
        %s577 = scalar_lea.vmem %s3, %s539
        %s578 = scalar_lea.vmem [#allocation3], 4
        %s579 = scalar_lea.sflag [#allocation4], 12
        // Predicated region
        $region303: #{tpu_custom_call.1} parent=31 // pred_check
          _
        $region304: #{tpu_custom_call.1} parent=31 // pred_check_branch
          %581 = sbr.rel target = $region306
        $region305: #{tpu_custom_call.1} parent=31 // pred_region
          // Predicated region
          $region318: #{tpu_custom_call.1} parent=305 // pred_check
            _
          $region319: #{tpu_custom_call.1} parent=305 // pred_check_branch
            %597 = sbr.rel (0) target = $region321
          $region320: #{tpu_custom_call.1} parent=305 // pred_region
            %s599 = ssub.s32 2, 1
            loop: start=0, step=1, limit=1
            $region322: #{tpu_custom_call.1} parent=320 // loop_pre_header
              _
            $region323: #{tpu_custom_call.1} parent=320 // loop_header
              %s601 = sphi 0, %s605
              %p602 = scmp.ge.s32.totalorder %s601, 1
              %s606 = sphi %s577, %s577
              %s607 = sphi %s578, %s578
            $region324: #{tpu_custom_call.1} parent=320 // loop_header_branch
              %604 = sbr.rel (%p602) target = $region328
            $region325: #{tpu_custom_call.1} parent=320 // loop_body
              %v608 = vld [vmem:[%s606] sm:%s599]
              %609 = vst [vmem:[%s607] sm:%s599] %v608
            $region326: #{tpu_custom_call.1} parent=320 // loop_footer
              %s605 = sadd.s32 1, %s601
            $region327: #{tpu_custom_call.1} parent=320 // loop_footer_branch
              %600 = sbr.rel target = $region323
            $region328: #{tpu_custom_call.1} parent=320 // loop_exit
              _
          $region321: #{tpu_custom_call.1} parent=305 // pred_fallthru
            _
        $region306: #{tpu_custom_call.1} parent=31 // pred_fallthru
          _
        // Predicated region
        $region307: #{tpu_custom_call.1} parent=31 // pred_check
          _
        $region308: #{tpu_custom_call.1} parent=31 // pred_check_branch
          %583 = sbr.rel (0) target = $region310
        $region309: #{tpu_custom_call.1} parent=31 // pred_region
          %s585 = ssub.s32 2, 1
          loop: start=0, step=1, limit=1
          $region311: #{tpu_custom_call.1} parent=309 // loop_pre_header
            _
          $region312: #{tpu_custom_call.1} parent=309 // loop_header
            %s587 = sphi 0, %s591
            %p588 = scmp.ge.s32.totalorder %s587, 1
            %s592 = sphi %s577, %s577
            %s593 = sphi %s578, %s578
          $region313: #{tpu_custom_call.1} parent=309 // loop_header_branch
            %590 = sbr.rel (%p588) target = $region317
          $region314: #{tpu_custom_call.1} parent=309 // loop_body
            %v594 = vld [vmem:[%s592] sm:%s585]
            %595 = vst [vmem:[%s593] sm:%s585] %v594
          $region315: #{tpu_custom_call.1} parent=309 // loop_footer
            %s591 = sadd.s32 1, %s587
          $region316: #{tpu_custom_call.1} parent=309 // loop_footer_branch
            %586 = sbr.rel target = $region312
          $region317: #{tpu_custom_call.1} parent=309 // loop_exit
            _
        $region310: #{tpu_custom_call.1} parent=31 // pred_fallthru
          _
        // Predicated region
        $region329: #{tpu_custom_call.1} parent=31 // pred_check
          _
        $region330: #{tpu_custom_call.1} parent=31 // pred_check_branch
          %612 = sbr.rel (0) target = $region332
        $region331: #{tpu_custom_call.1} parent=31 // pred_region
          %613 = vsyncadd %s579, 16
        $region332: #{tpu_custom_call.1} parent=31 // pred_fallthru
          _
        %s614 = sadd.s32 %s197, 5
        %s615 = sshra.s32 %s614, 7
        %s616 = sand.u32 %s614, 127
        %s617 = sadd.s32 %s615, %s38
        %s618 = smul.u32 %s617, 128
        %s619 = sshra.s32 %s614, 7
        %s620 = sand.u32 %s614, 127
        %s621 = sadd.s32 %s618, %s620
        %s622 = sld [smem:[#allocation6 + %s621]]
        %s623 = sld [smem:[#allocation7 + %s621]]
        %s624 = scalar_lea.vmem %s2, %s622
        %s625 = scalar_lea.vmem [#allocation2], 5
        %s626 = scalar_lea.sflag [#allocation4], 5
        // Predicated region
        $region333: #{tpu_custom_call.1} parent=31 // pred_check
          _
        $region334: #{tpu_custom_call.1} parent=31 // pred_check_branch
          %628 = sbr.rel target = $region336
        $region335: #{tpu_custom_call.1} parent=31 // pred_region
          // Predicated region
          $region348: #{tpu_custom_call.1} parent=335 // pred_check
            _
          $region349: #{tpu_custom_call.1} parent=335 // pred_check_branch
            %644 = sbr.rel (0) target = $region351
          $region350: #{tpu_custom_call.1} parent=335 // pred_region
            %s646 = ssub.s32 2, 1
            loop: start=0, step=1, limit=1
            $region352: #{tpu_custom_call.1} parent=350 // loop_pre_header
              _
            $region353: #{tpu_custom_call.1} parent=350 // loop_header
              %s648 = sphi 0, %s652
              %p649 = scmp.ge.s32.totalorder %s648, 1
              %s653 = sphi %s624, %s624
              %s654 = sphi %s625, %s625
            $region354: #{tpu_custom_call.1} parent=350 // loop_header_branch
              %651 = sbr.rel (%p649) target = $region358
            $region355: #{tpu_custom_call.1} parent=350 // loop_body
              %v655 = vld [vmem:[%s653] sm:%s646]
              %656 = vst [vmem:[%s654] sm:%s646] %v655
            $region356: #{tpu_custom_call.1} parent=350 // loop_footer
              %s652 = sadd.s32 1, %s648
            $region357: #{tpu_custom_call.1} parent=350 // loop_footer_branch
              %647 = sbr.rel target = $region353
            $region358: #{tpu_custom_call.1} parent=350 // loop_exit
              _
          $region351: #{tpu_custom_call.1} parent=335 // pred_fallthru
            _
        $region336: #{tpu_custom_call.1} parent=31 // pred_fallthru
          _
        // Predicated region
        $region337: #{tpu_custom_call.1} parent=31 // pred_check
          _
        $region338: #{tpu_custom_call.1} parent=31 // pred_check_branch
          %630 = sbr.rel (0) target = $region340
        $region339: #{tpu_custom_call.1} parent=31 // pred_region
          %s632 = ssub.s32 2, 1
          loop: start=0, step=1, limit=1
          $region341: #{tpu_custom_call.1} parent=339 // loop_pre_header
            _
          $region342: #{tpu_custom_call.1} parent=339 // loop_header
            %s634 = sphi 0, %s638
            %p635 = scmp.ge.s32.totalorder %s634, 1
            %s639 = sphi %s624, %s624
            %s640 = sphi %s625, %s625
          $region343: #{tpu_custom_call.1} parent=339 // loop_header_branch
            %637 = sbr.rel (%p635) target = $region347
          $region344: #{tpu_custom_call.1} parent=339 // loop_body
            %v641 = vld [vmem:[%s639] sm:%s632]
            %642 = vst [vmem:[%s640] sm:%s632] %v641
          $region345: #{tpu_custom_call.1} parent=339 // loop_footer
            %s638 = sadd.s32 1, %s634
          $region346: #{tpu_custom_call.1} parent=339 // loop_footer_branch
            %633 = sbr.rel target = $region342
          $region347: #{tpu_custom_call.1} parent=339 // loop_exit
            _
        $region340: #{tpu_custom_call.1} parent=31 // pred_fallthru
          _
        // Predicated region
        $region359: #{tpu_custom_call.1} parent=31 // pred_check
          _
        $region360: #{tpu_custom_call.1} parent=31 // pred_check_branch
          %659 = sbr.rel (0) target = $region362
        $region361: #{tpu_custom_call.1} parent=31 // pred_region
          %660 = vsyncadd %s626, 16
        $region362: #{tpu_custom_call.1} parent=31 // pred_fallthru
          _
        %s661 = scalar_lea.vmem %s3, %s623
        %s662 = scalar_lea.vmem [#allocation3], 5
        %s663 = scalar_lea.sflag [#allocation4], 13
        // Predicated region
        $region363: #{tpu_custom_call.1} parent=31 // pred_check
          _
        $region364: #{tpu_custom_call.1} parent=31 // pred_check_branch
          %665 = sbr.rel target = $region366
        $region365: #{tpu_custom_call.1} parent=31 // pred_region
          // Predicated region
          $region378: #{tpu_custom_call.1} parent=365 // pred_check
            _
          $region379: #{tpu_custom_call.1} parent=365 // pred_check_branch
            %681 = sbr.rel (0) target = $region381
          $region380: #{tpu_custom_call.1} parent=365 // pred_region
            %s683 = ssub.s32 2, 1
            loop: start=0, step=1, limit=1
            $region382: #{tpu_custom_call.1} parent=380 // loop_pre_header
              _
            $region383: #{tpu_custom_call.1} parent=380 // loop_header
              %s685 = sphi 0, %s689
              %p686 = scmp.ge.s32.totalorder %s685, 1
              %s690 = sphi %s661, %s661
              %s691 = sphi %s662, %s662
            $region384: #{tpu_custom_call.1} parent=380 // loop_header_branch
              %688 = sbr.rel (%p686) target = $region388
            $region385: #{tpu_custom_call.1} parent=380 // loop_body
              %v692 = vld [vmem:[%s690] sm:%s683]
              %693 = vst [vmem:[%s691] sm:%s683] %v692
            $region386: #{tpu_custom_call.1} parent=380 // loop_footer
              %s689 = sadd.s32 1, %s685
            $region387: #{tpu_custom_call.1} parent=380 // loop_footer_branch
              %684 = sbr.rel target = $region383
            $region388: #{tpu_custom_call.1} parent=380 // loop_exit
              _
          $region381: #{tpu_custom_call.1} parent=365 // pred_fallthru
            _
        $region366: #{tpu_custom_call.1} parent=31 // pred_fallthru
          _
        // Predicated region
        $region367: #{tpu_custom_call.1} parent=31 // pred_check
          _
        $region368: #{tpu_custom_call.1} parent=31 // pred_check_branch
          %667 = sbr.rel (0) target = $region370
        $region369: #{tpu_custom_call.1} parent=31 // pred_region
          %s669 = ssub.s32 2, 1
          loop: start=0, step=1, limit=1
          $region371: #{tpu_custom_call.1} parent=369 // loop_pre_header
            _
          $region372: #{tpu_custom_call.1} parent=369 // loop_header
            %s671 = sphi 0, %s675
            %p672 = scmp.ge.s32.totalorder %s671, 1
            %s676 = sphi %s661, %s661
            %s677 = sphi %s662, %s662
          $region373: #{tpu_custom_call.1} parent=369 // loop_header_branch
            %674 = sbr.rel (%p672) target = $region377
          $region374: #{tpu_custom_call.1} parent=369 // loop_body
            %v678 = vld [vmem:[%s676] sm:%s669]
            %679 = vst [vmem:[%s677] sm:%s669] %v678
          $region375: #{tpu_custom_call.1} parent=369 // loop_footer
            %s675 = sadd.s32 1, %s671
          $region376: #{tpu_custom_call.1} parent=369 // loop_footer_branch
            %670 = sbr.rel target = $region372
          $region377: #{tpu_custom_call.1} parent=369 // loop_exit
            _
        $region370: #{tpu_custom_call.1} parent=31 // pred_fallthru
          _
        // Predicated region
        $region389: #{tpu_custom_call.1} parent=31 // pred_check
          _
        $region390: #{tpu_custom_call.1} parent=31 // pred_check_branch
          %696 = sbr.rel (0) target = $region392
        $region391: #{tpu_custom_call.1} parent=31 // pred_region
          %697 = vsyncadd %s663, 16
        $region392: #{tpu_custom_call.1} parent=31 // pred_fallthru
          _
        %s698 = sadd.s32 %s197, 6
        %s699 = sshra.s32 %s698, 7
        %s700 = sand.u32 %s698, 127
        %s701 = sadd.s32 %s699, %s38
        %s702 = smul.u32 %s701, 128
        %s703 = sshra.s32 %s698, 7
        %s704 = sand.u32 %s698, 127
        %s705 = sadd.s32 %s702, %s704
        %s706 = sld [smem:[#allocation6 + %s705]]
        %s707 = sld [smem:[#allocation7 + %s705]]
        %s708 = scalar_lea.vmem %s2, %s706
        %s709 = scalar_lea.vmem [#allocation2], 6
        %s710 = scalar_lea.sflag [#allocation4], 6
        // Predicated region
        $region393: #{tpu_custom_call.1} parent=31 // pred_check
          _
        $region394: #{tpu_custom_call.1} parent=31 // pred_check_branch
          %712 = sbr.rel target = $region396
        $region395: #{tpu_custom_call.1} parent=31 // pred_region
          // Predicated region
          $region408: #{tpu_custom_call.1} parent=395 // pred_check
            _
          $region409: #{tpu_custom_call.1} parent=395 // pred_check_branch
            %728 = sbr.rel (0) target = $region411
          $region410: #{tpu_custom_call.1} parent=395 // pred_region
            %s730 = ssub.s32 2, 1
            loop: start=0, step=1, limit=1
            $region412: #{tpu_custom_call.1} parent=410 // loop_pre_header
              _
            $region413: #{tpu_custom_call.1} parent=410 // loop_header
              %s732 = sphi 0, %s736
              %p733 = scmp.ge.s32.totalorder %s732, 1
              %s737 = sphi %s708, %s708
              %s738 = sphi %s709, %s709
            $region414: #{tpu_custom_call.1} parent=410 // loop_header_branch
              %735 = sbr.rel (%p733) target = $region418
            $region415: #{tpu_custom_call.1} parent=410 // loop_body
              %v739 = vld [vmem:[%s737] sm:%s730]
              %740 = vst [vmem:[%s738] sm:%s730] %v739
            $region416: #{tpu_custom_call.1} parent=410 // loop_footer
              %s736 = sadd.s32 1, %s732
            $region417: #{tpu_custom_call.1} parent=410 // loop_footer_branch
              %731 = sbr.rel target = $region413
            $region418: #{tpu_custom_call.1} parent=410 // loop_exit
              _
          $region411: #{tpu_custom_call.1} parent=395 // pred_fallthru
            _
        $region396: #{tpu_custom_call.1} parent=31 // pred_fallthru
          _
        // Predicated region
        $region397: #{tpu_custom_call.1} parent=31 // pred_check
          _
        $region398: #{tpu_custom_call.1} parent=31 // pred_check_branch
          %714 = sbr.rel (0) target = $region400
        $region399: #{tpu_custom_call.1} parent=31 // pred_region
          %s716 = ssub.s32 2, 1
          loop: start=0, step=1, limit=1
          $region401: #{tpu_custom_call.1} parent=399 // loop_pre_header
            _
          $region402: #{tpu_custom_call.1} parent=399 // loop_header
            %s718 = sphi 0, %s722
            %p719 = scmp.ge.s32.totalorder %s718, 1
            %s723 = sphi %s708, %s708
            %s724 = sphi %s709, %s709
          $region403: #{tpu_custom_call.1} parent=399 // loop_header_branch
            %721 = sbr.rel (%p719) target = $region407
          $region404: #{tpu_custom_call.1} parent=399 // loop_body
            %v725 = vld [vmem:[%s723] sm:%s716]
            %726 = vst [vmem:[%s724] sm:%s716] %v725
          $region405: #{tpu_custom_call.1} parent=399 // loop_footer
            %s722 = sadd.s32 1, %s718
          $region406: #{tpu_custom_call.1} parent=399 // loop_footer_branch
            %717 = sbr.rel target = $region402
          $region407: #{tpu_custom_call.1} parent=399 // loop_exit
            _
        $region400: #{tpu_custom_call.1} parent=31 // pred_fallthru
          _
        // Predicated region
        $region419: #{tpu_custom_call.1} parent=31 // pred_check
          _
        $region420: #{tpu_custom_call.1} parent=31 // pred_check_branch
          %743 = sbr.rel (0) target = $region422
        $region421: #{tpu_custom_call.1} parent=31 // pred_region
          %744 = vsyncadd %s710, 16
        $region422: #{tpu_custom_call.1} parent=31 // pred_fallthru
          _
        %s745 = scalar_lea.vmem %s3, %s707
        %s746 = scalar_lea.vmem [#allocation3], 6
        %s747 = scalar_lea.sflag [#allocation4], 14
        // Predicated region
        $region423: #{tpu_custom_call.1} parent=31 // pred_check
          _
        $region424: #{tpu_custom_call.1} parent=31 // pred_check_branch
          %749 = sbr.rel target = $region426
        $region425: #{tpu_custom_call.1} parent=31 // pred_region
          // Predicated region
          $region438: #{tpu_custom_call.1} parent=425 // pred_check
            _
          $region439: #{tpu_custom_call.1} parent=425 // pred_check_branch
            %765 = sbr.rel (0) target = $region441
          $region440: #{tpu_custom_call.1} parent=425 // pred_region
            %s767 = ssub.s32 2, 1
            loop: start=0, step=1, limit=1
            $region442: #{tpu_custom_call.1} parent=440 // loop_pre_header
              _
            $region443: #{tpu_custom_call.1} parent=440 // loop_header
              %s769 = sphi 0, %s773
              %p770 = scmp.ge.s32.totalorder %s769, 1
              %s774 = sphi %s745, %s745
              %s775 = sphi %s746, %s746
            $region444: #{tpu_custom_call.1} parent=440 // loop_header_branch
              %772 = sbr.rel (%p770) target = $region448
            $region445: #{tpu_custom_call.1} parent=440 // loop_body
              %v776 = vld [vmem:[%s774] sm:%s767]
              %777 = vst [vmem:[%s775] sm:%s767] %v776
            $region446: #{tpu_custom_call.1} parent=440 // loop_footer
              %s773 = sadd.s32 1, %s769
            $region447: #{tpu_custom_call.1} parent=440 // loop_footer_branch
              %768 = sbr.rel target = $region443
            $region448: #{tpu_custom_call.1} parent=440 // loop_exit
              _
          $region441: #{tpu_custom_call.1} parent=425 // pred_fallthru
            _
        $region426: #{tpu_custom_call.1} parent=31 // pred_fallthru
          _
        // Predicated region
        $region427: #{tpu_custom_call.1} parent=31 // pred_check
          _
        $region428: #{tpu_custom_call.1} parent=31 // pred_check_branch
          %751 = sbr.rel (0) target = $region430
        $region429: #{tpu_custom_call.1} parent=31 // pred_region
          %s753 = ssub.s32 2, 1
          loop: start=0, step=1, limit=1
          $region431: #{tpu_custom_call.1} parent=429 // loop_pre_header
            _
          $region432: #{tpu_custom_call.1} parent=429 // loop_header
            %s755 = sphi 0, %s759
            %p756 = scmp.ge.s32.totalorder %s755, 1
            %s760 = sphi %s745, %s745
            %s761 = sphi %s746, %s746
          $region433: #{tpu_custom_call.1} parent=429 // loop_header_branch
            %758 = sbr.rel (%p756) target = $region437
          $region434: #{tpu_custom_call.1} parent=429 // loop_body
            %v762 = vld [vmem:[%s760] sm:%s753]
            %763 = vst [vmem:[%s761] sm:%s753] %v762
          $region435: #{tpu_custom_call.1} parent=429 // loop_footer
            %s759 = sadd.s32 1, %s755
          $region436: #{tpu_custom_call.1} parent=429 // loop_footer_branch
            %754 = sbr.rel target = $region432
          $region437: #{tpu_custom_call.1} parent=429 // loop_exit
            _
        $region430: #{tpu_custom_call.1} parent=31 // pred_fallthru
          _
        // Predicated region
        $region449: #{tpu_custom_call.1} parent=31 // pred_check
          _
        $region450: #{tpu_custom_call.1} parent=31 // pred_check_branch
          %780 = sbr.rel (0) target = $region452
        $region451: #{tpu_custom_call.1} parent=31 // pred_region
          %781 = vsyncadd %s747, 16
        $region452: #{tpu_custom_call.1} parent=31 // pred_fallthru
          _
        %s782 = sadd.s32 %s197, 7
        %s783 = sshra.s32 %s782, 7
        %s784 = sand.u32 %s782, 127
        %s785 = sadd.s32 %s783, %s38
        %s786 = smul.u32 %s785, 128
        %s787 = sshra.s32 %s782, 7
        %s788 = sand.u32 %s782, 127
        %s789 = sadd.s32 %s786, %s788
        %s790 = sld [smem:[#allocation6 + %s789]]
        %s791 = sld [smem:[#allocation7 + %s789]]
        %s792 = scalar_lea.vmem %s2, %s790
        %s793 = scalar_lea.vmem [#allocation2], 7
        %s794 = scalar_lea.sflag [#allocation4], 7
        // Predicated region
        $region453: #{tpu_custom_call.1} parent=31 // pred_check
          _
        $region454: #{tpu_custom_call.1} parent=31 // pred_check_branch
          %796 = sbr.rel target = $region456
        $region455: #{tpu_custom_call.1} parent=31 // pred_region
          // Predicated region
          $region468: #{tpu_custom_call.1} parent=455 // pred_check
            _
          $region469: #{tpu_custom_call.1} parent=455 // pred_check_branch
            %812 = sbr.rel (0) target = $region471
          $region470: #{tpu_custom_call.1} parent=455 // pred_region
            %s814 = ssub.s32 2, 1
            loop: start=0, step=1, limit=1
            $region472: #{tpu_custom_call.1} parent=470 // loop_pre_header
              _
            $region473: #{tpu_custom_call.1} parent=470 // loop_header
              %s816 = sphi 0, %s820
              %p817 = scmp.ge.s32.totalorder %s816, 1
              %s821 = sphi %s792, %s792
              %s822 = sphi %s793, %s793
            $region474: #{tpu_custom_call.1} parent=470 // loop_header_branch
              %819 = sbr.rel (%p817) target = $region478
            $region475: #{tpu_custom_call.1} parent=470 // loop_body
              %v823 = vld [vmem:[%s821] sm:%s814]
              %824 = vst [vmem:[%s822] sm:%s814] %v823
            $region476: #{tpu_custom_call.1} parent=470 // loop_footer
              %s820 = sadd.s32 1, %s816
            $region477: #{tpu_custom_call.1} parent=470 // loop_footer_branch
              %815 = sbr.rel target = $region473
            $region478: #{tpu_custom_call.1} parent=470 // loop_exit
              _
          $region471: #{tpu_custom_call.1} parent=455 // pred_fallthru
            _
        $region456: #{tpu_custom_call.1} parent=31 // pred_fallthru
          _
        // Predicated region
        $region457: #{tpu_custom_call.1} parent=31 // pred_check
          _
        $region458: #{tpu_custom_call.1} parent=31 // pred_check_branch
          %798 = sbr.rel (0) target = $region460
        $region459: #{tpu_custom_call.1} parent=31 // pred_region
          %s800 = ssub.s32 2, 1
          loop: start=0, step=1, limit=1
          $region461: #{tpu_custom_call.1} parent=459 // loop_pre_header
            _
          $region462: #{tpu_custom_call.1} parent=459 // loop_header
            %s802 = sphi 0, %s806
            %p803 = scmp.ge.s32.totalorder %s802, 1
            %s807 = sphi %s792, %s792
            %s808 = sphi %s793, %s793
          $region463: #{tpu_custom_call.1} parent=459 // loop_header_branch
            %805 = sbr.rel (%p803) target = $region467
          $region464: #{tpu_custom_call.1} parent=459 // loop_body
            %v809 = vld [vmem:[%s807] sm:%s800]
            %810 = vst [vmem:[%s808] sm:%s800] %v809
          $region465: #{tpu_custom_call.1} parent=459 // loop_footer
            %s806 = sadd.s32 1, %s802
          $region466: #{tpu_custom_call.1} parent=459 // loop_footer_branch
            %801 = sbr.rel target = $region462
          $region467: #{tpu_custom_call.1} parent=459 // loop_exit
            _
        $region460: #{tpu_custom_call.1} parent=31 // pred_fallthru
          _
        // Predicated region
        $region479: #{tpu_custom_call.1} parent=31 // pred_check
          _
        $region480: #{tpu_custom_call.1} parent=31 // pred_check_branch
          %827 = sbr.rel (0) target = $region482
        $region481: #{tpu_custom_call.1} parent=31 // pred_region
          %828 = vsyncadd %s794, 16
        $region482: #{tpu_custom_call.1} parent=31 // pred_fallthru
          _
        %s829 = scalar_lea.vmem %s3, %s791
        %s830 = scalar_lea.vmem [#allocation3], 7
        %s831 = scalar_lea.sflag [#allocation4], 15
        // Predicated region
        $region483: #{tpu_custom_call.1} parent=31 // pred_check
          _
        $region484: #{tpu_custom_call.1} parent=31 // pred_check_branch
          %833 = sbr.rel target = $region486
        $region485: #{tpu_custom_call.1} parent=31 // pred_region
          // Predicated region
          $region498: #{tpu_custom_call.1} parent=485 // pred_check
            _
          $region499: #{tpu_custom_call.1} parent=485 // pred_check_branch
            %849 = sbr.rel (0) target = $region501
          $region500: #{tpu_custom_call.1} parent=485 // pred_region
            %s851 = ssub.s32 2, 1
            loop: start=0, step=1, limit=1
            $region502: #{tpu_custom_call.1} parent=500 // loop_pre_header
              _
            $region503: #{tpu_custom_call.1} parent=500 // loop_header
              %s853 = sphi 0, %s857
              %p854 = scmp.ge.s32.totalorder %s853, 1
              %s858 = sphi %s829, %s829
              %s859 = sphi %s830, %s830
            $region504: #{tpu_custom_call.1} parent=500 // loop_header_branch
              %856 = sbr.rel (%p854) target = $region508
            $region505: #{tpu_custom_call.1} parent=500 // loop_body
              %v860 = vld [vmem:[%s858] sm:%s851]
              %861 = vst [vmem:[%s859] sm:%s851] %v860
            $region506: #{tpu_custom_call.1} parent=500 // loop_footer
              %s857 = sadd.s32 1, %s853
            $region507: #{tpu_custom_call.1} parent=500 // loop_footer_branch
              %852 = sbr.rel target = $region503
            $region508: #{tpu_custom_call.1} parent=500 // loop_exit
              _
          $region501: #{tpu_custom_call.1} parent=485 // pred_fallthru
            _
        $region486: #{tpu_custom_call.1} parent=31 // pred_fallthru
          _
        // Predicated region
        $region487: #{tpu_custom_call.1} parent=31 // pred_check
          _
        $region488: #{tpu_custom_call.1} parent=31 // pred_check_branch
          %835 = sbr.rel (0) target = $region490
        $region489: #{tpu_custom_call.1} parent=31 // pred_region
          %s837 = ssub.s32 2, 1
          loop: start=0, step=1, limit=1
          $region491: #{tpu_custom_call.1} parent=489 // loop_pre_header
            _
          $region492: #{tpu_custom_call.1} parent=489 // loop_header
            %s839 = sphi 0, %s843
            %p840 = scmp.ge.s32.totalorder %s839, 1
            %s844 = sphi %s829, %s829
            %s845 = sphi %s830, %s830
          $region493: #{tpu_custom_call.1} parent=489 // loop_header_branch
            %842 = sbr.rel (%p840) target = $region497
          $region494: #{tpu_custom_call.1} parent=489 // loop_body
            %v846 = vld [vmem:[%s844] sm:%s837]
            %847 = vst [vmem:[%s845] sm:%s837] %v846
          $region495: #{tpu_custom_call.1} parent=489 // loop_footer
            %s843 = sadd.s32 1, %s839
          $region496: #{tpu_custom_call.1} parent=489 // loop_footer_branch
            %838 = sbr.rel target = $region492
          $region497: #{tpu_custom_call.1} parent=489 // loop_exit
            _
        $region490: #{tpu_custom_call.1} parent=31 // pred_fallthru
          _
        // Predicated region
        $region509: #{tpu_custom_call.1} parent=31 // pred_check
          _
        $region510: #{tpu_custom_call.1} parent=31 // pred_check_branch
          %864 = sbr.rel (0) target = $region512
        $region511: #{tpu_custom_call.1} parent=31 // pred_region
          %865 = vsyncadd %s831, 16
        $region512: #{tpu_custom_call.1} parent=31 // pred_fallthru
          _
        %s866 = smul.u32 1, 1
        %s867 = sshll.u32 %s866, 4
        %868 = dma.done [#allocation4], %s867
        %s869 = sshll.u32 %s866, 4
        %870 = dma.done %s243, %s869
        %s871 = sshll.u32 %s866, 4
        %872 = dma.done %s290, %s871
        %s873 = sshll.u32 %s866, 4
        %874 = dma.done %s327, %s873
        %s875 = sshll.u32 %s866, 4
        %876 = dma.done %s374, %s875
        %s877 = sshll.u32 %s866, 4
        %878 = dma.done %s411, %s877
        %s879 = sshll.u32 %s866, 4
        %880 = dma.done %s458, %s879
        %s881 = sshll.u32 %s866, 4
        %882 = dma.done %s495, %s881
        %s883 = sshll.u32 %s866, 4
        %884 = dma.done %s542, %s883
        %s885 = sshll.u32 %s866, 4
        %886 = dma.done %s579, %s885
        %s887 = sshll.u32 %s866, 4
        %888 = dma.done %s626, %s887
        %s889 = sshll.u32 %s866, 4
        %890 = dma.done %s663, %s889
        %s891 = sshll.u32 %s866, 4
        %892 = dma.done %s710, %s891
        %s893 = sshll.u32 %s866, 4
        %894 = dma.done %s747, %s893
        %s895 = sshll.u32 %s866, 4
        %896 = dma.done %s794, %s895
        %s897 = sshll.u32 %s866, 4
        %898 = dma.done %s831, %s897
        %v899 = vld [vmem:[#allocation2] sm:$0xff]
        %v900 = vld [vmem:[#allocation3] sm:$0xff]
        %v901 = vadd.f32 %v899, %v900
        %v902 = vld [vmem:[%s196] sm:$0xff]
        %v903 = vadd.f32 %v901, %v902
        %vm904 = vcmask 261120
        %v905 = vsel %vm904, %v903, 0.0
        %906 = vadd.xlane.f32.xlu0 %v905
        %v907 = vpop.xlane.xlu0 %906
        %v908 = vrcp.pop 32.0
        %v909 = vmul.f32 32.0, %v908
        %v910 = vsub.f32 1.0, %v909
        %v911 = vmul.f32 %v908, %v910
        %v912 = vadd.f32 %v908, %v911
        %vm913 = vweird.f32 %v908
        %v914 = vsel %vm913, %v908, %v912
        %v915 = vmul.f32 %v907, %v914
        %v916 = vsub.f32 %v903, %v915
        %v917 = vmul.f32 %v916, %v916
        %v918 = vsel %vm904, %v917, 0.0
        %919 = vadd.xlane.f32.xlu0 %v918
        %v920 = vpop.xlane.xlu0 %919
        %v921 = vmul.f32 %v920, %v914
        %v922 = vadd.f32 %v921, 1e-12
        %v923 = vrsqrt.pop %v922
        %v924 = vmul.f32 %v923, %v922
        %v925 = vmul.f32 %v924, %v923
        %v926 = vmul.f32 0.5, %v925
        %v927 = vsub.f32 1.5, %v926
        %v928 = vmul.f32 %v923, %v927
        %vm929 = vweird.f32 %v922
        %vm930 = vweird.f32 %v923
        %vm931 = vmor %vm929, %vm930
        %v932 = vsel %vm931, %v923, %v928
        %v933 = vmul.f32 %v916, %v932
        %v934 = vld [vmem:[%s5] sm:$0x1]
        %v936 = vperm.slane %v934, 0
        %v938 = vmul.f32 %v933, %v936
        %v939 = vld [vmem:[%s6] sm:$0x1]
        %v941 = vperm.slane %v939, 0
        %v943 = vadd.f32 %v938, %v941
        %944 = vst.msk [vmem:[%s192] sm:$0xff] %vm904, %v943
        %s945 = sand.u32 %s124, 1
        %s946 = scalar_lea.sflag [#allocation9], %s945
        %s947 = sand.u32 %s124, 1
        %s948 = smul.addr %s947, 8
        %s949 = scalar_lea.vmem [#allocation8], %s948
        // Predicated region
        $region513: #{tpu_custom_call.1} parent=31 // pred_check
          %p950 = pneg %p134
        $region514: #{tpu_custom_call.1} parent=31 // pred_check_branch
          %952 = sbr.rel (%p950) target = $region516
        $region515: #{tpu_custom_call.1} parent=31 // pred_region
          %954 = vsyncadd %s946, 0
          %s955 = sadd.s32 %s39, %s38
          %s956 = smul.addr %s955, 8
          %s957 = scalar_lea.hbm %s7, %s956
          %s959 = sshll.u32 %s949, 4
          %s960 = int_to_ptr.vmem [resolvable:$true] %s959
          %s961 = sshll.u32 %s957, 4
          %s962 = int_to_ptr.hbm [resolvable:$true] %s961
          %964 = dma.vmem_to_hbm [thread:$0]  %s960, 128, %s962, %s946
        $region516: #{tpu_custom_call.1} parent=31 // pred_fallthru
          _
      $region32: #{tpu_custom_call.1} parent=5 // pred_fallthru
        _
      %p965 = scmp.le.s32.totalorder 2, %s29
      // Predicated region
      $region517: #{tpu_custom_call.1} parent=5 // pred_check
        %p966 = pneg %p965
      $region518: #{tpu_custom_call.1} parent=5 // pred_check_branch
        %968 = sbr.rel (%p966) target = $region520
      $region519: #{tpu_custom_call.1} parent=5 // pred_region
        %s969 = ssub.s32 %s29, 2
        // Predicated region
        $region521: #{tpu_custom_call.1} parent=519 // pred_check
          %p970 = pneg %p140
        $region522: #{tpu_custom_call.1} parent=519 // pred_check_branch
          %972 = sbr.rel (%p970) target = $region524
        $region523: #{tpu_custom_call.1} parent=519 // pred_region
          %s973 = sand.u32 %s125, 1
          %s974 = scalar_lea.sflag [#allocation9], %s973
          %s975 = sand.u32 %s125, 1
          %s976 = smul.addr %s975, 8
          %s977 = scalar_lea.vmem [#allocation8], %s976
          %979 = dma.done %s974, 128
        $region524: #{tpu_custom_call.1} parent=519 // pred_fallthru
          _
      $region520: #{tpu_custom_call.1} parent=5 // pred_fallthru
        _
    $region6: #{tpu_custom_call.1} parent=1 // loop_footer
      %s33 = sadd.s32 1, %s29
    $region7: #{tpu_custom_call.1} parent=1 // loop_footer_branch
      %28 = sbr.rel target = $region3
    $region8: #{tpu_custom_call.1} parent=1 // loop_exit
      _
    %980 = vsyncpa [#allocation9], 1
    %s981 = scalar_lea.sflag [#allocation9], 1
    %982 = vsyncpa %s981, 1
  %983 = vsyncmov [#allocation4]
  %s984 = vpop.sfrf %983
  %p985 = scmp.eq.s32.totalorder %s984, 0
  %p986 = pneg %p985
  %988 = shalt.err (%p986)
  %s989 = scalar_lea.sflag [#allocation4], 1
  %990 = vsyncmov %s989
  %s991 = vpop.sfrf %990
  %p992 = scmp.eq.s32.totalorder %s991, 0
  %p993 = pneg %p992
  %995 = shalt.err (%p993)
  %s996 = scalar_lea.sflag [#allocation4], 2
  %997 = vsyncmov %s996
  %s998 = vpop.sfrf %997
  %p999 = scmp.eq.s32.totalorder %s998, 0
  %p1000 = pneg %p999
  %1002 = shalt.err (%p1000)
  %s1003 = scalar_lea.sflag [#allocation4], 3
  %1004 = vsyncmov %s1003
  %s1005 = vpop.sfrf %1004
  %p1006 = scmp.eq.s32.totalorder %s1005, 0
  %p1007 = pneg %p1006
  %1009 = shalt.err (%p1007)
  %s1010 = scalar_lea.sflag [#allocation4], 4
  %1011 = vsyncmov %s1010
  %s1012 = vpop.sfrf %1011
  %p1013 = scmp.eq.s32.totalorder %s1012, 0
  %p1014 = pneg %p1013
  %1016 = shalt.err (%p1014)
  %s1017 = scalar_lea.sflag [#allocation4], 5
  %1018 = vsyncmov %s1017
  %s1019 = vpop.sfrf %1018
  %p1020 = scmp.eq.s32.totalorder %s1019, 0
  %p1021 = pneg %p1020
  %1023 = shalt.err (%p1021)
  %s1024 = scalar_lea.sflag [#allocation4], 6
  %1025 = vsyncmov %s1024
  %s1026 = vpop.sfrf %1025
  %p1027 = scmp.eq.s32.totalorder %s1026, 0
  %p1028 = pneg %p1027
  %1030 = shalt.err (%p1028)
  %s1031 = scalar_lea.sflag [#allocation4], 7
  %1032 = vsyncmov %s1031
  %s1033 = vpop.sfrf %1032
  %p1034 = scmp.eq.s32.totalorder %s1033, 0
  %p1035 = pneg %p1034
  %1037 = shalt.err (%p1035)
  %s1038 = scalar_lea.sflag [#allocation4], 8
  %1039 = vsyncmov %s1038
  %s1040 = vpop.sfrf %1039
  %p1041 = scmp.eq.s32.totalorder %s1040, 0
  %p1042 = pneg %p1041
  %1044 = shalt.err (%p1042)
  %s1045 = scalar_lea.sflag [#allocation4], 9
  %1046 = vsyncmov %s1045
  %s1047 = vpop.sfrf %1046
  %p1048 = scmp.eq.s32.totalorder %s1047, 0
  %p1049 = pneg %p1048
  %1051 = shalt.err (%p1049)
  %s1052 = scalar_lea.sflag [#allocation4], 10
  %1053 = vsyncmov %s1052
  %s1054 = vpop.sfrf %1053
  %p1055 = scmp.eq.s32.totalorder %s1054, 0
  %p1056 = pneg %p1055
  %1058 = shalt.err (%p1056)
  %s1059 = scalar_lea.sflag [#allocation4], 11
  %1060 = vsyncmov %s1059
  %s1061 = vpop.sfrf %1060
  %p1062 = scmp.eq.s32.totalorder %s1061, 0
  %p1063 = pneg %p1062
  %1065 = shalt.err (%p1063)
  %s1066 = scalar_lea.sflag [#allocation4], 12
  %1067 = vsyncmov %s1066
  %s1068 = vpop.sfrf %1067
  %p1069 = scmp.eq.s32.totalorder %s1068, 0
  %p1070 = pneg %p1069
  %1072 = shalt.err (%p1070)
  %s1073 = scalar_lea.sflag [#allocation4], 13
  %1074 = vsyncmov %s1073
  %s1075 = vpop.sfrf %1074
  %p1076 = scmp.eq.s32.totalorder %s1075, 0
  %p1077 = pneg %p1076
  %1079 = shalt.err (%p1077)
  %s1080 = scalar_lea.sflag [#allocation4], 14
  %1081 = vsyncmov %s1080
  %s1082 = vpop.sfrf %1081
  %p1083 = scmp.eq.s32.totalorder %s1082, 0
  %p1084 = pneg %p1083
  %1086 = shalt.err (%p1084)
  %s1087 = scalar_lea.sflag [#allocation4], 15
  %1088 = vsyncmov %s1087
  %s1089 = vpop.sfrf %1088
  %p1090 = scmp.eq.s32.totalorder %s1089, 0
  %p1091 = pneg %p1090
  %1093 = shalt.err (%p1091)

</llo_original>
